<compile_context>
chip_gen: v7x
topology: tpu7x:2x2x1
jax: 0.10.0
libtpu: 0.0.40
codegen_flags: <defaults>
</compile_context>

<pallas_src>
import functools

import jax
import jax.numpy as jnp
from jax import lax
from jax.experimental import pallas as pl
from jax.experimental.pallas import tpu as pltpu


def _encoder_kernel(x_ref, w1_ref, s1_ref, b1_ref, w2_ref, s2_ref, b2_ref,
                    sel_ref, xout_ref, pout_ref,
                    padA_ref, padB_ref, colA_ref, colB_ref,
                    *, H, W, Cin, Cout):
  HW = H * W
  base = 1 + W          # start of the valid image inside the padded flat buffer
  halo = W + 1          # top / bottom halo length (lanes)

  # Hoisted horizontal-wrap masks, shared by both convs (shape (1, HW)).
  wcol = lax.broadcasted_iota(jnp.int32, (1, HW), 1) % W
  mask_l = wcol > 0            # left neighbour valid  (kx == 0 taps)
  mask_r = wcol < (W - 1)      # right neighbour valid (kx == 2 taps)

  def stage_and_conv(pad_ref, col_ref, src, w_ref, cin):
    """pad -> im2col staging -> one (Cout, 9*cin) x (9*cin, HW) MXU matmul."""
    # Zero only the halos; the interior is fully overwritten every step.
    zhalo = jnp.zeros((cin, halo), jnp.float32)
    pad_ref[:, pl.ds(0, halo)] = zhalo
    pad_ref[:, pl.ds(base + HW, halo)] = zhalo
    pad_ref[:, pl.ds(base, HW)] = src
    # 9 shifted (cin, HW) patches stacked along the contraction dim.
    for t in range(9):
      ky, kx = t // 3, t % 3
      patch = pad_ref[:, pl.ds(ky * W + kx, HW)]
      if kx == 0:
        patch = jnp.where(mask_l, patch, 0.0)
      elif kx == 2:
        patch = jnp.where(mask_r, patch, 0.0)
      col_ref[pl.ds(t * cin, cin), :] = patch
    return jnp.dot(w_ref[...], col_ref[...],
                   preferred_element_type=jnp.float32)

  # ---- conv1 + BN1 (folded) + ReLU ----
  y1 = stage_and_conv(padA_ref, colA_ref, x_ref[...], w1_ref, Cin)
  y1 = jnp.maximum(y1 * s1_ref[...] + b1_ref[...], 0.0)

  # ---- conv2 + BN2 (folded) + ReLU ----
  y2 = stage_and_conv(padB_ref, colB_ref, y1, w2_ref, Cout)
  y2 = jnp.maximum(y2 * s2_ref[...] + b2_ref[...], 0.0)

  xout_ref[...] = y2        # lane-dense (Cout, HW) store

  # ---- 2x2 / stride-2 max pool, from the y2 value ----
  # Reuse padB: interior <- y2 (halos are already zero), shifted slices give
  # the +1 / +W / +W+1 neighbours; the selection matmul compacts the lanes at
  # p = 2i*W + 2j into q = i*(W/2) + j exactly (0/1 matrix).
  padB_ref[:, pl.ds(base, HW)] = y2
  p01 = padB_ref[:, pl.ds(base + 1, HW)]
  p10 = padB_ref[:, pl.ds(base + W, HW)]
  p11 = padB_ref[:, pl.ds(base + W + 1, HW)]
  cand = jnp.maximum(jnp.maximum(y2, p01), jnp.maximum(p10, p11))
  pout_ref[...] = jnp.dot(cand, sel_ref[...],
                          preferred_element_type=jnp.float32)


def encoder_block_pallas(x_nchw, w1_oihw, bn1, w2_oihw, bn2, eps=1e-5):
  """Forward of encoder_block. Inputs/outputs in PyTorch NCHW convention."""
  B, Cin, H, W = x_nchw.shape
  Cout = w1_oihw.shape[0]
  assert H % 2 == 0 and W % 2 == 0, "maxpool(2,2) assumes even H, W"
  HW = H * W
  Hp, Wp = H // 2, W // 2
  HWp = Hp * Wp
  PADN = HW + 2 * W + 2                      # flat vertically padded length

  # Layout glue (all free reshapes — NCHW flat is already channels-on-sublanes).
  x_flat = x_nchw.reshape(B, Cin, HW).astype(jnp.float32)
  w1 = jnp.transpose(w1_oihw, (0, 2, 3, 1)).reshape(Cout, 9 * Cin).astype(jnp.float32)
  w2 = jnp.transpose(w2_oihw, (0, 2, 3, 1)).reshape(Cout, 9 * Cout).astype(jnp.float32)

  def fold(bn):
    g, b, m, v = bn
    s = g / jnp.sqrt(v + eps)
    return (s.reshape(Cout, 1).astype(jnp.float32),
            (b - m * s).reshape(Cout, 1).astype(jnp.float32))

  s1, b1 = fold(bn1)
  s2, b2 = fold(bn2)

  # 0/1 selection matrix compacting lanes (2i*W + 2j) -> (i*Wp + j).
  q = jnp.arange(HWp)
  src = (2 * (q // Wp)) * W + 2 * (q % Wp)
  sel = (jnp.arange(HW)[:, None] == src[None, :]).astype(jnp.float32)

  kernel = functools.partial(_encoder_kernel, H=H, W=W, Cin=Cin, Cout=Cout)

  grid_spec = pltpu.PrefetchScalarGridSpec(
      num_scalar_prefetch=0,
      grid=(B,),
      in_specs=[
          pl.BlockSpec((None, Cin, HW), lambda b: (b, 0, 0)),
          pl.BlockSpec((Cout, 9 * Cin), lambda b: (0, 0)),
          pl.BlockSpec((Cout, 1), lambda b: (0, 0)),
          pl.BlockSpec((Cout, 1), lambda b: (0, 0)),
          pl.BlockSpec((Cout, 9 * Cout), lambda b: (0, 0)),
          pl.BlockSpec((Cout, 1), lambda b: (0, 0)),
          pl.BlockSpec((Cout, 1), lambda b: (0, 0)),
          pl.BlockSpec((HW, HWp), lambda b: (0, 0)),
      ],
      out_specs=[
          pl.BlockSpec((None, Cout, HW), lambda b: (b, 0, 0)),
          pl.BlockSpec((None, Cout, HWp), lambda b: (b, 0, 0)),
      ],
      scratch_shapes=[
          pltpu.VMEM((Cin, PADN), jnp.float32),      # padded input (conv1)
          pltpu.VMEM((Cout, PADN), jnp.float32),     # padded y1 / y2 (conv2 + pool)
          pltpu.VMEM((9 * Cin, HW), jnp.float32),    # im2col for conv1
          pltpu.VMEM((9 * Cout, HW), jnp.float32),   # im2col for conv2
      ],
  )

  x_out_flat, p_out_flat = pl.pallas_call(
      kernel,
      out_shape=(jax.ShapeDtypeStruct((B, Cout, HW), jnp.float32),
                 jax.ShapeDtypeStruct((B, Cout, HWp), jnp.float32)),
      grid_spec=grid_spec,
      compiler_params=pltpu.CompilerParams(
          dimension_semantics=("parallel",),     # batch elems split across TCs (v7x)
          vmem_limit_bytes=16 * 1024 * 1024),    # far above the ~0.3 MiB footprint
  )(x_flat, w1, s1, b1, w2, s2, b2, sel)

  x_out = x_out_flat.reshape(B, Cout, H, W)
  p_out = p_out_flat.reshape(B, Cout, Hp, Wp)
  return x_out, p_out


def _ref_forward(x, w1, bn1, w2, bn2, eps=1e-5):
  """Pure-JAX reference (NCHW), eval-mode BN."""
  def conv(z, w):
    return lax.conv_general_dilated(z, w, window_strides=(1, 1),
                                    padding=((1, 1), (1, 1)),
                                    dimension_numbers=("NCHW", "OIHW", "NCHW"))
  def bn_relu(z, bn):
    g, b, m, v = bn
    s = g / jnp.sqrt(v + eps)
    return jnp.maximum(z * s[None, :, None, None] + (b - m * s)[None, :, None, None], 0.0)

  y = bn_relu(conv(x, w1), bn1)
  y = bn_relu(conv(y, w2), bn2)
  p = lax.reduce_window(y, -jnp.inf, lax.max, (1, 1, 2, 2), (1, 1, 2, 2), "VALID")
  return y, p


if __name__ == "__main__":
  B, Cin, Cout, H, W = 2, 4, 8, 16, 16

  key = jax.random.PRNGKey(0)
  ks = jax.random.split(key, 12)
  x = jax.random.normal(ks[0], (B, Cin, H, W), jnp.float32)
  w1 = jax.random.normal(ks[1], (Cout, Cin, 3, 3), jnp.float32) * 0.1
  w2 = jax.random.normal(ks[2], (Cout, Cout, 3, 3), jnp.float32) * 0.1
  bn1 = (jax.random.uniform(ks[3], (Cout,), jnp.float32, 0.5, 1.5),   # gamma
         jax.random.normal(ks[4], (Cout,), jnp.float32) * 0.1,        # beta
         jax.random.normal(ks[5], (Cout,), jnp.float32) * 0.1,        # running_mean
         jax.random.uniform(ks[6], (Cout,), jnp.float32, 0.5, 1.5))   # running_var
  bn2 = (jax.random.uniform(ks[7], (Cout,), jnp.float32, 0.5, 1.5),
         jax.random.normal(ks[8], (Cout,), jnp.float32) * 0.1,
         jax.random.normal(ks[9], (Cout,), jnp.float32) * 0.1,
         jax.random.uniform(ks[10], (Cout,), jnp.float32, 0.5, 1.5))

  x_out, p_out = encoder_block_pallas(x, w1, bn1, w2, bn2)
  jax.block_until_ready((x_out, p_out))

  x_ref, p_ref = _ref_forward(x, w1, bn1, w2, bn2)
  assert x_out.shape == (B, Cout, H, W) and p_out.shape == (B, Cout, H // 2, W // 2)
  assert jnp.allclose(x_out, x_ref, atol=1e-4, rtol=1e-4), "conv block mismatch"
  assert jnp.allclose(p_out, p_ref, atol=1e-4, rtol=1e-4), "maxpool mismatch"

  print("KERNEL_OK")
</pallas_src>

<mosaic_0001>
module attributes {stable_mosaic.version = 11 : i64} {
  func.func @_encoder_kernel(%arg0: i32, %arg1: memref<1x4x256xf32, #tpu.memory_space<vmem>>, %arg2: memref<8x36xf32, #tpu.memory_space<vmem>>, %arg3: memref<8x1xf32, #tpu.memory_space<vmem>>, %arg4: memref<8x1xf32, #tpu.memory_space<vmem>>, %arg5: memref<8x72xf32, #tpu.memory_space<vmem>>, %arg6: memref<8x1xf32, #tpu.memory_space<vmem>>, %arg7: memref<8x1xf32, #tpu.memory_space<vmem>>, %arg8: memref<256x64xf32, #tpu.memory_space<vmem>>, %arg9: memref<1x8x256xf32, #tpu.memory_space<vmem>>, %arg10: memref<1x8x64xf32, #tpu.memory_space<vmem>>, %arg11: memref<4x290xf32, #tpu.memory_space<vmem>>, %arg12: memref<8x290xf32, #tpu.memory_space<vmem>>, %arg13: memref<36x256xf32, #tpu.memory_space<vmem>>, %arg14: memref<72x256xf32, #tpu.memory_space<vmem>>) attributes {dimension_semantics = [#tpu.dimension_semantics<parallel>], iteration_bounds = array<i64: 2>, scalar_prefetch = 0 : i64, scratch_operands = 4 : i64, tpu.core_type = #tpu.core_type<tc>, window_params = [{transform_indices = @transform_0, window_bounds = array<i64: 1, 4, 256>}, {pipeline_mode = #tpu.pipeline_mode<synchronous>, transform_indices = @transform_1, window_bounds = array<i64: 8, 36>}, {pipeline_mode = #tpu.pipeline_mode<synchronous>, transform_indices = @transform_2, window_bounds = array<i64: 8, 1>}, {pipeline_mode = #tpu.pipeline_mode<synchronous>, transform_indices = @transform_3, window_bounds = array<i64: 8, 1>}, {pipeline_mode = #tpu.pipeline_mode<synchronous>, transform_indices = @transform_4, window_bounds = array<i64: 8, 72>}, {pipeline_mode = #tpu.pipeline_mode<synchronous>, transform_indices = @transform_5, window_bounds = array<i64: 8, 1>}, {pipeline_mode = #tpu.pipeline_mode<synchronous>, transform_indices = @transform_6, window_bounds = array<i64: 8, 1>}, {pipeline_mode = #tpu.pipeline_mode<synchronous>, transform_indices = @transform_7, window_bounds = array<i64: 256, 64>}, {transform_indices = @transform_8, window_bounds = array<i64: 1, 8, 256>}, {transform_indices = @transform_9, window_bounds = array<i64: 1, 8, 64>}]} {
    %0 = tpu.iota {dimensions = array<i32: 1>} : vector<1x256xi32>
    %c16_i32 = arith.constant 16 : i32
    %c0_i32 = arith.constant 0 : i32
    %1 = arith.cmpi eq, %c16_i32, %c0_i32 : i32
    %c1_i32 = arith.constant 1 : i32
    %2 = arith.select %1, %c1_i32, %c16_i32 : i32
    %3 = vector.broadcast %2 : i32 to vector<1x256xi32>
    %4 = arith.remsi %0, %3 : vector<1x256xi32>
    %c0_i32_0 = arith.constant 0 : i32
    %5 = vector.broadcast %c0_i32_0 : i32 to vector<1x256xi32>
    %6 = arith.cmpi ne, %4, %5 : vector<1x256xi32>
    %c0_i32_1 = arith.constant 0 : i32
    %7 = vector.broadcast %c0_i32_1 : i32 to vector<1x256xi32>
    %8 = arith.cmpi slt, %4, %7 : vector<1x256xi32>
    %c0_i32_2 = arith.constant 0 : i32
    %9 = arith.cmpi slt, %2, %c0_i32_2 : i32
    %10 = vector.broadcast %9 : i1 to vector<1x256xi1>
    %11 = vector.broadcast %10 : vector<1x256xi1> to vector<1x256xi1>
    %12 = arith.xori %8, %11 : vector<1x256xi1>
    %13 = arith.andi %12, %6 : vector<1x256xi1>
    %14 = vector.broadcast %2 : i32 to vector<1x256xi32>
    %15 = arith.addi %4, %14 : vector<1x256xi32>
    %16 = arith.select %13, %15, %4 : vector<1x256xi1>, vector<1x256xi32>
    %c0_i32_3 = arith.constant 0 : i32
    %17 = vector.broadcast %c0_i32_3 : i32 to vector<1x256xi32>
    %18 = arith.cmpi sgt, %16, %17 : vector<1x256xi32>
    %c15_i32 = arith.constant 15 : i32
    %19 = vector.broadcast %c15_i32 : i32 to vector<1x256xi32>
    %20 = arith.cmpi slt, %16, %19 : vector<1x256xi32>
    %c0 = arith.constant 0 : index
    %c0_4 = arith.constant 0 : index
    %c0_5 = arith.constant 0 : index
    %21 = vector.load %arg1[%c0, %c0_4, %c0_5] : memref<1x4x256xf32, #tpu.memory_space<vmem>>, vector<1x4x256xf32>
    %22 = vector.shape_cast %21 : vector<1x4x256xf32> to vector<4x256xf32>
    %cst = arith.constant 0.000000e+00 : f32
    %23 = vector.broadcast %cst : f32 to vector<4x17xf32>
    %c0_6 = arith.constant 0 : index
    %c0_7 = arith.constant 0 : index
    %24 = vector.load %arg11[%c0_6, %c0_7] : memref<4x290xf32, #tpu.memory_space<vmem>>, vector<4x17xf32>
    tpu.vector_store %arg11[%c0_6, %c0_7], %23 {strides = array<i32>} : memref<4x290xf32, #tpu.memory_space<vmem>>, vector<4x17xf32>,
    %c0_8 = arith.constant 0 : index
    %c273 = arith.constant 273 : index
    %25 = vector.load %arg11[%c0_8, %c273] : memref<4x290xf32, #tpu.memory_space<vmem>>, vector<4x17xf32>
    tpu.vector_store %arg11[%c0_8, %c273], %23 {strides = array<i32>} : memref<4x290xf32, #tpu.memory_space<vmem>>, vector<4x17xf32>,
    %c0_9 = arith.constant 0 : index
    %c17 = arith.constant 17 : index
    %26 = vector.load %arg11[%c0_9, %c17] : memref<4x290xf32, #tpu.memory_space<vmem>>, vector<4x256xf32>
    tpu.vector_store %arg11[%c0_9, %c17], %22 {strides = array<i32>} : memref<4x290xf32, #tpu.memory_space<vmem>>, vector<4x256xf32>,
    %c0_10 = arith.constant 0 : index
    %c0_11 = arith.constant 0 : index
    %27 = vector.load %arg11[%c0_10, %c0_11] : memref<4x290xf32, #tpu.memory_space<vmem>>, vector<4x256xf32>
    %cst_12 = arith.constant 0.000000e+00 : f32
    %28 = vector.shape_cast %18 : vector<1x256xi1> to vector<1x256xi1>
    %29 = vector.broadcast %28 : vector<1x256xi1> to vector<4x256xi1>
    %30 = vector.broadcast %cst_12 : f32 to vector<4x256xf32>
    %31 = arith.select %29, %27, %30 : vector<4x256xi1>, vector<4x256xf32>
    %c0_13 = arith.constant 0 : index
    %c0_14 = arith.constant 0 : index
    %32 = vector.load %arg13[%c0_13, %c0_14] : memref<36x256xf32, #tpu.memory_space<vmem>>, vector<4x256xf32>
    tpu.vector_store %arg13[%c0_13, %c0_14], %31 {strides = array<i32>} : memref<36x256xf32, #tpu.memory_space<vmem>>, vector<4x256xf32>,
    %c0_15 = arith.constant 0 : index
    %c1 = arith.constant 1 : index
    %33 = vector.load %arg11[%c0_15, %c1] : memref<4x290xf32, #tpu.memory_space<vmem>>, vector<4x256xf32>
    %c4 = arith.constant 4 : index
    %c0_16 = arith.constant 0 : index
    %34 = vector.load %arg13[%c4, %c0_16] : memref<36x256xf32, #tpu.memory_space<vmem>>, vector<4x256xf32>
    tpu.vector_store %arg13[%c4, %c0_16], %33 {strides = array<i32>} : memref<36x256xf32, #tpu.memory_space<vmem>>, vector<4x256xf32>,
    %c0_17 = arith.constant 0 : index
    %c2 = arith.constant 2 : index
    %35 = vector.load %arg11[%c0_17, %c2] : memref<4x290xf32, #tpu.memory_space<vmem>>, vector<4x256xf32>
    %cst_18 = arith.constant 0.000000e+00 : f32
    %36 = vector.shape_cast %20 : vector<1x256xi1> to vector<1x256xi1>
    %37 = vector.broadcast %36 : vector<1x256xi1> to vector<4x256xi1>
    %38 = vector.broadcast %cst_18 : f32 to vector<4x256xf32>
    %39 = arith.select %37, %35, %38 : vector<4x256xi1>, vector<4x256xf32>
    %c8 = arith.constant 8 : index
    %c0_19 = arith.constant 0 : index
    %40 = vector.load %arg13[%c8, %c0_19] : memref<36x256xf32, #tpu.memory_space<vmem>>, vector<4x256xf32>
    tpu.vector_store %arg13[%c8, %c0_19], %39 {strides = array<i32>} : memref<36x256xf32, #tpu.memory_space<vmem>>, vector<4x256xf32>,
    %c0_20 = arith.constant 0 : index
    %c16 = arith.constant 16 : index
    %41 = vector.load %arg11[%c0_20, %c16] : memref<4x290xf32, #tpu.memory_space<vmem>>, vector<4x256xf32>
    %cst_21 = arith.constant 0.000000e+00 : f32
    %42 = vector.shape_cast %18 : vector<1x256xi1> to vector<1x256xi1>
    %43 = vector.broadcast %42 : vector<1x256xi1> to vector<4x256xi1>
    %44 = vector.broadcast %cst_21 : f32 to vector<4x256xf32>
    %45 = arith.select %43, %41, %44 : vector<4x256xi1>, vector<4x256xf32>
    %c12 = arith.constant 12 : index
    %c0_22 = arith.constant 0 : index
    %46 = vector.load %arg13[%c12, %c0_22] : memref<36x256xf32, #tpu.memory_space<vmem>>, vector<4x256xf32>
    tpu.vector_store %arg13[%c12, %c0_22], %45 {strides = array<i32>} : memref<36x256xf32, #tpu.memory_space<vmem>>, vector<4x256xf32>,
    %c0_23 = arith.constant 0 : index
    %c17_24 = arith.constant 17 : index
    %47 = vector.load %arg11[%c0_23, %c17_24] : memref<4x290xf32, #tpu.memory_space<vmem>>, vector<4x256xf32>
    %c16_25 = arith.constant 16 : index
    %c0_26 = arith.constant 0 : index
    %48 = vector.load %arg13[%c16_25, %c0_26] : memref<36x256xf32, #tpu.memory_space<vmem>>, vector<4x256xf32>
    tpu.vector_store %arg13[%c16_25, %c0_26], %47 {strides = array<i32>} : memref<36x256xf32, #tpu.memory_space<vmem>>, vector<4x256xf32>,
    %c0_27 = arith.constant 0 : index
    %c18 = arith.constant 18 : index
    %49 = vector.load %arg11[%c0_27, %c18] : memref<4x290xf32, #tpu.memory_space<vmem>>, vector<4x256xf32>
    %cst_28 = arith.constant 0.000000e+00 : f32
    %50 = vector.shape_cast %20 : vector<1x256xi1> to vector<1x256xi1>
    %51 = vector.broadcast %50 : vector<1x256xi1> to vector<4x256xi1>
    %52 = vector.broadcast %cst_28 : f32 to vector<4x256xf32>
    %53 = arith.select %51, %49, %52 : vector<4x256xi1>, vector<4x256xf32>
    %c20 = arith.constant 20 : index
    %c0_29 = arith.constant 0 : index
    %54 = vector.load %arg13[%c20, %c0_29] : memref<36x256xf32, #tpu.memory_space<vmem>>, vector<4x256xf32>
    tpu.vector_store %arg13[%c20, %c0_29], %53 {strides = array<i32>} : memref<36x256xf32, #tpu.memory_space<vmem>>, vector<4x256xf32>,
    %c0_30 = arith.constant 0 : index
    %c32 = arith.constant 32 : index
    %55 = vector.load %arg11[%c0_30, %c32] : memref<4x290xf32, #tpu.memory_space<vmem>>, vector<4x256xf32>
    %cst_31 = arith.constant 0.000000e+00 : f32
    %56 = vector.shape_cast %18 : vector<1x256xi1> to vector<1x256xi1>
    %57 = vector.broadcast %56 : vector<1x256xi1> to vector<4x256xi1>
    %58 = vector.broadcast %cst_31 : f32 to vector<4x256xf32>
    %59 = arith.select %57, %55, %58 : vector<4x256xi1>, vector<4x256xf32>
    %c24 = arith.constant 24 : index
    %c0_32 = arith.constant 0 : index
    %60 = vector.load %arg13[%c24, %c0_32] : memref<36x256xf32, #tpu.memory_space<vmem>>, vector<4x256xf32>
    tpu.vector_store %arg13[%c24, %c0_32], %59 {strides = array<i32>} : memref<36x256xf32, #tpu.memory_space<vmem>>, vector<4x256xf32>,
    %c0_33 = arith.constant 0 : index
    %c33 = arith.constant 33 : index
    %61 = vector.load %arg11[%c0_33, %c33] : memref<4x290xf32, #tpu.memory_space<vmem>>, vector<4x256xf32>
    %c28 = arith.constant 28 : index
    %c0_34 = arith.constant 0 : index
    %62 = vector.load %arg13[%c28, %c0_34] : memref<36x256xf32, #tpu.memory_space<vmem>>, vector<4x256xf32>
    tpu.vector_store %arg13[%c28, %c0_34], %61 {strides = array<i32>} : memref<36x256xf32, #tpu.memory_space<vmem>>, vector<4x256xf32>,
    %c0_35 = arith.constant 0 : index
    %c34 = arith.constant 34 : index
    %63 = vector.load %arg11[%c0_35, %c34] : memref<4x290xf32, #tpu.memory_space<vmem>>, vector<4x256xf32>
    %cst_36 = arith.constant 0.000000e+00 : f32
    %64 = vector.shape_cast %20 : vector<1x256xi1> to vector<1x256xi1>
    %65 = vector.broadcast %64 : vector<1x256xi1> to vector<4x256xi1>
    %66 = vector.broadcast %cst_36 : f32 to vector<4x256xf32>
    %67 = arith.select %65, %63, %66 : vector<4x256xi1>, vector<4x256xf32>
    %c32_37 = arith.constant 32 : index
    %c0_38 = arith.constant 0 : index
    %68 = vector.load %arg13[%c32_37, %c0_38] : memref<36x256xf32, #tpu.memory_space<vmem>>, vector<4x256xf32>
    tpu.vector_store %arg13[%c32_37, %c0_38], %67 {strides = array<i32>} : memref<36x256xf32, #tpu.memory_space<vmem>>, vector<4x256xf32>,
    %c0_39 = arith.constant 0 : index
    %c0_40 = arith.constant 0 : index
    %69 = vector.load %arg2[%c0_39, %c0_40] : memref<8x36xf32, #tpu.memory_space<vmem>>, vector<8x36xf32>
    %c0_41 = arith.constant 0 : index
    %c0_42 = arith.constant 0 : index
    %70 = vector.load %arg13[%c0_41, %c0_42] : memref<36x256xf32, #tpu.memory_space<vmem>>, vector<36x256xf32>
    %cst_43 = arith.constant dense<0.000000e+00> : vector<8x256xf32>
    %71 = tpu.matmul %69, %70, %cst_43 {dimension_numbers = #tpu.dot_dimension_numbers<[1], [0], [0], [1], [0, 0, 1, 1], [], []>} : vector<8x36xf32>, vector<36x256xf32>, vector<8x256xf32> -> vector<8x256xf32>
    %c0_44 = arith.constant 0 : index
    %c0_45 = arith.constant 0 : index
    %72 = vector.load %arg3[%c0_44, %c0_45] : memref<8x1xf32, #tpu.memory_space<vmem>>, vector<8x1xf32>
    %73 = vector.broadcast %72 : vector<8x1xf32> to vector<8x256xf32>
    %74 = arith.mulf %71, %73 : vector<8x256xf32>
    %c0_46 = arith.constant 0 : index
    %c0_47 = arith.constant 0 : index
    %75 = vector.load %arg4[%c0_46, %c0_47] : memref<8x1xf32, #tpu.memory_space<vmem>>, vector<8x1xf32>
    %76 = vector.broadcast %75 : vector<8x1xf32> to vector<8x256xf32>
    %77 = arith.addf %74, %76 : vector<8x256xf32>
    %cst_48 = arith.constant 0.000000e+00 : f32
    %78 = vector.broadcast %cst_48 : f32 to vector<8x256xf32>
    %79 = arith.maximumf %77, %78 : vector<8x256xf32>
    %cst_49 = arith.constant 0.000000e+00 : f32
    %80 = vector.broadcast %cst_49 : f32 to vector<8x17xf32>
    %c0_50 = arith.constant 0 : index
    %c0_51 = arith.constant 0 : index
    %81 = vector.load %arg12[%c0_50, %c0_51] : memref<8x290xf32, #tpu.memory_space<vmem>>, vector<8x17xf32>
    tpu.vector_store %arg12[%c0_50, %c0_51], %80 {strides = array<i32>} : memref<8x290xf32, #tpu.memory_space<vmem>>, vector<8x17xf32>,
    %c0_52 = arith.constant 0 : index
    %c273_53 = arith.constant 273 : index
    %82 = vector.load %arg12[%c0_52, %c273_53] : memref<8x290xf32, #tpu.memory_space<vmem>>, vector<8x17xf32>
    tpu.vector_store %arg12[%c0_52, %c273_53], %80 {strides = array<i32>} : memref<8x290xf32, #tpu.memory_space<vmem>>, vector<8x17xf32>,
    %c0_54 = arith.constant 0 : index
    %c17_55 = arith.constant 17 : index
    %83 = vector.load %arg12[%c0_54, %c17_55] : memref<8x290xf32, #tpu.memory_space<vmem>>, vector<8x256xf32>
    tpu.vector_store %arg12[%c0_54, %c17_55], %79 {strides = array<i32>} : memref<8x290xf32, #tpu.memory_space<vmem>>, vector<8x256xf32>,
    %c0_56 = arith.constant 0 : index
    %c0_57 = arith.constant 0 : index
    %84 = vector.load %arg12[%c0_56, %c0_57] : memref<8x290xf32, #tpu.memory_space<vmem>>, vector<8x256xf32>
    %cst_58 = arith.constant 0.000000e+00 : f32
    %85 = vector.shape_cast %18 : vector<1x256xi1> to vector<1x256xi1>
    %86 = vector.broadcast %85 : vector<1x256xi1> to vector<8x256xi1>
    %87 = vector.broadcast %cst_58 : f32 to vector<8x256xf32>
    %88 = arith.select %86, %84, %87 : vector<8x256xi1>, vector<8x256xf32>
    %c0_59 = arith.constant 0 : index
    %c0_60 = arith.constant 0 : index
    %89 = vector.load %arg14[%c0_59, %c0_60] : memref<72x256xf32, #tpu.memory_space<vmem>>, vector<8x256xf32>
    tpu.vector_store %arg14[%c0_59, %c0_60], %88 {strides = array<i32>} : memref<72x256xf32, #tpu.memory_space<vmem>>, vector<8x256xf32>,
    %c0_61 = arith.constant 0 : index
    %c1_62 = arith.constant 1 : index
    %90 = vector.load %arg12[%c0_61, %c1_62] : memref<8x290xf32, #tpu.memory_space<vmem>>, vector<8x256xf32>
    %c8_63 = arith.constant 8 : index
    %c0_64 = arith.constant 0 : index
    %91 = vector.load %arg14[%c8_63, %c0_64] : memref<72x256xf32, #tpu.memory_space<vmem>>, vector<8x256xf32>
    tpu.vector_store %arg14[%c8_63, %c0_64], %90 {strides = array<i32>} : memref<72x256xf32, #tpu.memory_space<vmem>>, vector<8x256xf32>,
    %c0_65 = arith.constant 0 : index
    %c2_66 = arith.constant 2 : index
    %92 = vector.load %arg12[%c0_65, %c2_66] : memref<8x290xf32, #tpu.memory_space<vmem>>, vector<8x256xf32>
    %cst_67 = arith.constant 0.000000e+00 : f32
    %93 = vector.shape_cast %20 : vector<1x256xi1> to vector<1x256xi1>
    %94 = vector.broadcast %93 : vector<1x256xi1> to vector<8x256xi1>
    %95 = vector.broadcast %cst_67 : f32 to vector<8x256xf32>
    %96 = arith.select %94, %92, %95 : vector<8x256xi1>, vector<8x256xf32>
    %c16_68 = arith.constant 16 : index
    %c0_69 = arith.constant 0 : index
    %97 = vector.load %arg14[%c16_68, %c0_69] : memref<72x256xf32, #tpu.memory_space<vmem>>, vector<8x256xf32>
    tpu.vector_store %arg14[%c16_68, %c0_69], %96 {strides = array<i32>} : memref<72x256xf32, #tpu.memory_space<vmem>>, vector<8x256xf32>,
    %c0_70 = arith.constant 0 : index
    %c16_71 = arith.constant 16 : index
    %98 = vector.load %arg12[%c0_70, %c16_71] : memref<8x290xf32, #tpu.memory_space<vmem>>, vector<8x256xf32>
    %cst_72 = arith.constant 0.000000e+00 : f32
    %99 = vector.shape_cast %18 : vector<1x256xi1> to vector<1x256xi1>
    %100 = vector.broadcast %99 : vector<1x256xi1> to vector<8x256xi1>
    %101 = vector.broadcast %cst_72 : f32 to vector<8x256xf32>
    %102 = arith.select %100, %98, %101 : vector<8x256xi1>, vector<8x256xf32>
    %c24_73 = arith.constant 24 : index
    %c0_74 = arith.constant 0 : index
    %103 = vector.load %arg14[%c24_73, %c0_74] : memref<72x256xf32, #tpu.memory_space<vmem>>, vector<8x256xf32>
    tpu.vector_store %arg14[%c24_73, %c0_74], %102 {strides = array<i32>} : memref<72x256xf32, #tpu.memory_space<vmem>>, vector<8x256xf32>,
    %c0_75 = arith.constant 0 : index
    %c17_76 = arith.constant 17 : index
    %104 = vector.load %arg12[%c0_75, %c17_76] : memref<8x290xf32, #tpu.memory_space<vmem>>, vector<8x256xf32>
    %c32_77 = arith.constant 32 : index
    %c0_78 = arith.constant 0 : index
    %105 = vector.load %arg14[%c32_77, %c0_78] : memref<72x256xf32, #tpu.memory_space<vmem>>, vector<8x256xf32>
    tpu.vector_store %arg14[%c32_77, %c0_78], %104 {strides = array<i32>} : memref<72x256xf32, #tpu.memory_space<vmem>>, vector<8x256xf32>,
    %c0_79 = arith.constant 0 : index
    %c18_80 = arith.constant 18 : index
    %106 = vector.load %arg12[%c0_79, %c18_80] : memref<8x290xf32, #tpu.memory_space<vmem>>, vector<8x256xf32>
    %cst_81 = arith.constant 0.000000e+00 : f32
    %107 = vector.shape_cast %20 : vector<1x256xi1> to vector<1x256xi1>
    %108 = vector.broadcast %107 : vector<1x256xi1> to vector<8x256xi1>
    %109 = vector.broadcast %cst_81 : f32 to vector<8x256xf32>
    %110 = arith.select %108, %106, %109 : vector<8x256xi1>, vector<8x256xf32>
    %c40 = arith.constant 40 : index
    %c0_82 = arith.constant 0 : index
    %111 = vector.load %arg14[%c40, %c0_82] : memref<72x256xf32, #tpu.memory_space<vmem>>, vector<8x256xf32>
    tpu.vector_store %arg14[%c40, %c0_82], %110 {strides = array<i32>} : memref<72x256xf32, #tpu.memory_space<vmem>>, vector<8x256xf32>,
    %c0_83 = arith.constant 0 : index
    %c32_84 = arith.constant 32 : index
    %112 = vector.load %arg12[%c0_83, %c32_84] : memref<8x290xf32, #tpu.memory_space<vmem>>, vector<8x256xf32>
    %cst_85 = arith.constant 0.000000e+00 : f32
    %113 = vector.shape_cast %18 : vector<1x256xi1> to vector<1x256xi1>
    %114 = vector.broadcast %113 : vector<1x256xi1> to vector<8x256xi1>
    %115 = vector.broadcast %cst_85 : f32 to vector<8x256xf32>
    %116 = arith.select %114, %112, %115 : vector<8x256xi1>, vector<8x256xf32>
    %c48 = arith.constant 48 : index
    %c0_86 = arith.constant 0 : index
    %117 = vector.load %arg14[%c48, %c0_86] : memref<72x256xf32, #tpu.memory_space<vmem>>, vector<8x256xf32>
    tpu.vector_store %arg14[%c48, %c0_86], %116 {strides = array<i32>} : memref<72x256xf32, #tpu.memory_space<vmem>>, vector<8x256xf32>,
    %c0_87 = arith.constant 0 : index
    %c33_88 = arith.constant 33 : index
    %118 = vector.load %arg12[%c0_87, %c33_88] : memref<8x290xf32, #tpu.memory_space<vmem>>, vector<8x256xf32>
    %c56 = arith.constant 56 : index
    %c0_89 = arith.constant 0 : index
    %119 = vector.load %arg14[%c56, %c0_89] : memref<72x256xf32, #tpu.memory_space<vmem>>, vector<8x256xf32>
    tpu.vector_store %arg14[%c56, %c0_89], %118 {strides = array<i32>} : memref<72x256xf32, #tpu.memory_space<vmem>>, vector<8x256xf32>,
    %c0_90 = arith.constant 0 : index
    %c34_91 = arith.constant 34 : index
    %120 = vector.load %arg12[%c0_90, %c34_91] : memref<8x290xf32, #tpu.memory_space<vmem>>, vector<8x256xf32>
    %cst_92 = arith.constant 0.000000e+00 : f32
    %121 = vector.shape_cast %20 : vector<1x256xi1> to vector<1x256xi1>
    %122 = vector.broadcast %121 : vector<1x256xi1> to vector<8x256xi1>
    %123 = vector.broadcast %cst_92 : f32 to vector<8x256xf32>
    %124 = arith.select %122, %120, %123 : vector<8x256xi1>, vector<8x256xf32>
    %c64 = arith.constant 64 : index
    %c0_93 = arith.constant 0 : index
    %125 = vector.load %arg14[%c64, %c0_93] : memref<72x256xf32, #tpu.memory_space<vmem>>, vector<8x256xf32>
    tpu.vector_store %arg14[%c64, %c0_93], %124 {strides = array<i32>} : memref<72x256xf32, #tpu.memory_space<vmem>>, vector<8x256xf32>,
    %c0_94 = arith.constant 0 : index
    %c0_95 = arith.constant 0 : index
    %126 = vector.load %arg5[%c0_94, %c0_95] : memref<8x72xf32, #tpu.memory_space<vmem>>, vector<8x72xf32>
    %c0_96 = arith.constant 0 : index
    %c0_97 = arith.constant 0 : index
    %127 = vector.load %arg14[%c0_96, %c0_97] : memref<72x256xf32, #tpu.memory_space<vmem>>, vector<72x256xf32>
    %cst_98 = arith.constant dense<0.000000e+00> : vector<8x256xf32>
    %128 = tpu.matmul %126, %127, %cst_98 {dimension_numbers = #tpu.dot_dimension_numbers<[1], [0], [0], [1], [0, 0, 1, 1], [], []>} : vector<8x72xf32>, vector<72x256xf32>, vector<8x256xf32> -> vector<8x256xf32>
    %c0_99 = arith.constant 0 : index
    %c0_100 = arith.constant 0 : index
    %129 = vector.load %arg6[%c0_99, %c0_100] : memref<8x1xf32, #tpu.memory_space<vmem>>, vector<8x1xf32>
    %130 = vector.broadcast %129 : vector<8x1xf32> to vector<8x256xf32>
    %131 = arith.mulf %128, %130 : vector<8x256xf32>
    %c0_101 = arith.constant 0 : index
    %c0_102 = arith.constant 0 : index
    %132 = vector.load %arg7[%c0_101, %c0_102] : memref<8x1xf32, #tpu.memory_space<vmem>>, vector<8x1xf32>
    %133 = vector.broadcast %132 : vector<8x1xf32> to vector<8x256xf32>
    %134 = arith.addf %131, %133 : vector<8x256xf32>
    %cst_103 = arith.constant 0.000000e+00 : f32
    %135 = vector.broadcast %cst_103 : f32 to vector<8x256xf32>
    %136 = arith.maximumf %134, %135 : vector<8x256xf32>
    %c0_104 = arith.constant 0 : index
    %c0_105 = arith.constant 0 : index
    %c0_106 = arith.constant 0 : index
    %137 = vector.load %arg9[%c0_104, %c0_105, %c0_106] : memref<1x8x256xf32, #tpu.memory_space<vmem>>, vector<1x8x256xf32>
    %138 = vector.shape_cast %137 : vector<1x8x256xf32> to vector<8x256xf32>
    %139 = vector.shape_cast %136 : vector<8x256xf32> to vector<1x8x256xf32>
    tpu.vector_store %arg9[%c0_104, %c0_105, %c0_106], %139 {strides = array<i32>} : memref<1x8x256xf32, #tpu.memory_space<vmem>>, vector<1x8x256xf32>,
    %c0_107 = arith.constant 0 : index
    %c17_108 = arith.constant 17 : index
    %140 = vector.load %arg12[%c0_107, %c17_108] : memref<8x290xf32, #tpu.memory_space<vmem>>, vector<8x256xf32>
    tpu.vector_store %arg12[%c0_107, %c17_108], %136 {strides = array<i32>} : memref<8x290xf32, #tpu.memory_space<vmem>>, vector<8x256xf32>,
    %c0_109 = arith.constant 0 : index
    %c18_110 = arith.constant 18 : index
    %141 = vector.load %arg12[%c0_109, %c18_110] : memref<8x290xf32, #tpu.memory_space<vmem>>, vector<8x256xf32>
    %c0_111 = arith.constant 0 : index
    %c33_112 = arith.constant 33 : index
    %142 = vector.load %arg12[%c0_111, %c33_112] : memref<8x290xf32, #tpu.memory_space<vmem>>, vector<8x256xf32>
    %c0_113 = arith.constant 0 : index
    %c34_114 = arith.constant 34 : index
    %143 = vector.load %arg12[%c0_113, %c34_114] : memref<8x290xf32, #tpu.memory_space<vmem>>, vector<8x256xf32>
    %144 = arith.maximumf %136, %141 : vector<8x256xf32>
    %145 = arith.maximumf %142, %143 : vector<8x256xf32>
    %146 = arith.maximumf %144, %145 : vector<8x256xf32>
    %c0_115 = arith.constant 0 : index
    %c0_116 = arith.constant 0 : index
    %147 = vector.load %arg8[%c0_115, %c0_116] : memref<256x64xf32, #tpu.memory_space<vmem>>, vector<256x64xf32>
    %cst_117 = arith.constant dense<0.000000e+00> : vector<8x64xf32>
    %148 = tpu.matmul %146, %147, %cst_117 {dimension_numbers = #tpu.dot_dimension_numbers<[1], [0], [0], [1], [0, 0, 1, 1], [], []>} : vector<8x256xf32>, vector<256x64xf32>, vector<8x64xf32> -> vector<8x64xf32>
    %c0_118 = arith.constant 0 : index
    %c0_119 = arith.constant 0 : index
    %c0_120 = arith.constant 0 : index
    %149 = vector.load %arg10[%c0_118, %c0_119, %c0_120] : memref<1x8x64xf32, #tpu.memory_space<vmem>>, vector<1x8x64xf32>
    %150 = vector.shape_cast %149 : vector<1x8x64xf32> to vector<8x64xf32>
    %151 = vector.shape_cast %148 : vector<8x64xf32> to vector<1x8x64xf32>
    tpu.vector_store %arg10[%c0_118, %c0_119, %c0_120], %151 {strides = array<i32>} : memref<1x8x64xf32, #tpu.memory_space<vmem>>, vector<1x8x64xf32>,
    return
  }
  func.func @transform_0(%arg0: i32) -> (i32, i32, i32) {
    %c0_i32 = arith.constant 0 : i32
    %c0_i32_0 = arith.constant 0 : i32
    %c0_i32_1 = arith.constant 0 : i32
    return %arg0, %c0_i32, %c0_i32_0 : i32, i32, i32
  }
  func.func @transform_1(%arg0: i32) -> (i32, i32) {
    %c0_i32 = arith.constant 0 : i32
    %c0_i32_0 = arith.constant 0 : i32
    %c0_i32_1 = arith.constant 0 : i32
    return %c0_i32, %c0_i32_0 : i32, i32
  }
  func.func @transform_2(%arg0: i32) -> (i32, i32) {
    %c0_i32 = arith.constant 0 : i32
    %c0_i32_0 = arith.constant 0 : i32
    %c0_i32_1 = arith.constant 0 : i32
    return %c0_i32, %c0_i32_0 : i32, i32
  }
  func.func @transform_3(%arg0: i32) -> (i32, i32) {
    %c0_i32 = arith.constant 0 : i32
    %c0_i32_0 = arith.constant 0 : i32
    %c0_i32_1 = arith.constant 0 : i32
    return %c0_i32, %c0_i32_0 : i32, i32
  }
  func.func @transform_4(%arg0: i32) -> (i32, i32) {
    %c0_i32 = arith.constant 0 : i32
    %c0_i32_0 = arith.constant 0 : i32
    %c0_i32_1 = arith.constant 0 : i32
    return %c0_i32, %c0_i32_0 : i32, i32
  }
  func.func @transform_5(%arg0: i32) -> (i32, i32) {
    %c0_i32 = arith.constant 0 : i32
    %c0_i32_0 = arith.constant 0 : i32
    %c0_i32_1 = arith.constant 0 : i32
    return %c0_i32, %c0_i32_0 : i32, i32
  }
  func.func @transform_6(%arg0: i32) -> (i32, i32) {
    %c0_i32 = arith.constant 0 : i32
    %c0_i32_0 = arith.constant 0 : i32
    %c0_i32_1 = arith.constant 0 : i32
    return %c0_i32, %c0_i32_0 : i32, i32
  }
  func.func @transform_7(%arg0: i32) -> (i32, i32) {
    %c0_i32 = arith.constant 0 : i32
    %c0_i32_0 = arith.constant 0 : i32
    %c0_i32_1 = arith.constant 0 : i32
    return %c0_i32, %c0_i32_0 : i32, i32
  }
  func.func @transform_8(%arg0: i32) -> (i32, i32, i32) {
    %c0_i32 = arith.constant 0 : i32
    %c0_i32_0 = arith.constant 0 : i32
    %c0_i32_1 = arith.constant 0 : i32
    return %arg0, %c0_i32, %c0_i32_0 : i32, i32, i32
  }
  func.func @transform_9(%arg0: i32) -> (i32, i32, i32) {
    %c0_i32 = arith.constant 0 : i32
    %c0_i32_0 = arith.constant 0 : i32
    %c0_i32_1 = arith.constant 0 : i32
    return %arg0, %c0_i32, %c0_i32_0 : i32, i32, i32
  }
}

</mosaic_0001>

<llo_original>
// kernel: tpu_custom_call.1
$region0: #{tpu_custom_call.1}
  #allocation0 [shape = 'u32[]', space=smem, size = 0x4, offset = 0x4, fixed_abs, tag = 'smem constant byte address 0x4 - core index']
  #allocation1 [shape = 'u32[144,128]{1,0:T(1,128)}', space=vmem, size = 0x12000, scoped, tag = 'internal scratch']
  #allocation2 [shape = 'f32[4,290]{1,0:T(4,128)}', space=vmem, size = 0x1800, scoped, tag = 'scratch operand']
  #allocation3 [shape = 'f32[8,290]{1,0:T(8,128)}', space=vmem, size = 0x3000, scoped, tag = 'scratch operand']
  #allocation4 [shape = 'f32[36,256]{1,0:T(8,128)}', space=vmem, size = 0xa000, scoped, tag = 'scratch operand']
  #allocation5 [shape = 'f32[72,256]{1,0:T(8,128)}', space=vmem, size = 0x12000, scoped, tag = 'scratch operand']
  %s0 = inlined_call_operand.vmem [shape: f32[2,4,256], index: 0, kind: input, shape index: {}]
  %s1 = inlined_call_operand.vmem [shape: f32[8,36], index: 1, kind: input, shape index: {}]
  %s2 = inlined_call_operand.vmem [shape: f32[8,1], index: 2, kind: input, shape index: {}]
  %s3 = inlined_call_operand.vmem [shape: f32[8,1], index: 3, kind: input, shape index: {}]
  %s4 = inlined_call_operand.vmem [shape: f32[8,72], index: 4, kind: input, shape index: {}]
  %s5 = inlined_call_operand.vmem [shape: f32[8,1], index: 5, kind: input, shape index: {}]
  %s6 = inlined_call_operand.vmem [shape: f32[8,1], index: 6, kind: input, shape index: {}]
  %s7 = inlined_call_operand.vmem [shape: f32[256,64], index: 7, kind: input, shape index: {}]
  %s8 = inlined_call_operand.hbm [shape: f32[2,8,256], index: 8, kind: output, shape index: {0}]
  %s9 = inlined_call_operand.hbm [shape: f32[2,8,64], index: 9, kind: output, shape index: {1}]
  %10 = xla_tuple %s8, %s9
  %s11 = sld [smem:[#allocation0]]
  $region73: #{tpu_custom_call.1} parent=0
    _
  %s13 = ssub.s32 1, %s11
  %s14 = scalar_select 0, %s13, %s11
  $region1: #{tpu_custom_call.1} parent=0
    #allocation6 [shape = 'u8[16384]{0}', space=vmem, size = 0x4000, scoped, tag = 'output window, operand 0']
    #allocation7 [shape = 's32[2]{0}', space=sflag, size = 0x8, scoped, tag = 'scoped memory for tpu_custom_call.1']
    #allocation8 [shape = 'u8[8192]{0}', space=vmem, size = 0x2000, scoped, tag = 'output window, operand 1']
    #allocation9 [shape = 's32[2]{0}', space=sflag, size = 0x8, scoped, tag = 'scoped memory for tpu_custom_call.1']
    %15 = vsyncpa [#allocation7], 0
    %s16 = scalar_lea.sflag [#allocation7], 1
    %17 = vsyncpa %s16, 0
    %18 = vsyncpa [#allocation9], 0
    %s19 = scalar_lea.sflag [#allocation9], 1
    %20 = vsyncpa %s19, 0
    loop: start=0, step=1, limit=4
    $region2: #{tpu_custom_call.1} parent=1 // loop_pre_header
      _
    $region3: #{tpu_custom_call.1} parent=1 // loop_header
      %s22 = sphi 0, %s26
      %p23 = scmp.ge.s32.totalorder %s22, 4
      %s32 = sphi 0, %s34
      %s35 = sphi 0, %s32
      %s36 = sphi 0, %s35
      %s52 = sphi 0, %s36
      %s56 = sphi 0, %s56
      %s58 = sphi 0, %s56
      %s59 = sphi 0, %s58
      %s73 = sphi 0, %s59
      %s77 = sphi 0, %s77
      %s79 = sphi 0, %s77
      %s80 = sphi 0, %s79
      %s94 = sphi 0, %s80
      %s98 = sphi 0, %s98
      %s100 = sphi 0, %s98
      %s101 = sphi 0, %s100
      %s115 = sphi 0, %s101
      %s119 = sphi 0, %s119
      %s121 = sphi 0, %s119
      %s122 = sphi 0, %s121
      %s136 = sphi 0, %s122
      %s140 = sphi 0, %s140
      %s142 = sphi 0, %s140
      %s143 = sphi 0, %s142
      %s157 = sphi 0, %s143
      %s161 = sphi 0, %s161
      %s163 = sphi 0, %s161
      %s164 = sphi 0, %s163
      %s178 = sphi 0, %s164
      %s182 = sphi 0, %s182
      %s184 = sphi 0, %s182
      %s185 = sphi 0, %s184
      %s199 = sphi 0, %s185
      %s205 = sphi 0, %s207
      %s208 = sphi 0, %s205
      %s209 = sphi 0, %s208
      %s225 = sphi 0, %s209
      %s231 = sphi 0, %s233
      %s234 = sphi 0, %s231
      %s235 = sphi 0, %s234
      %s251 = sphi 0, %s235
    $region4: #{tpu_custom_call.1} parent=1 // loop_header_branch
      %25 = sbr.rel (%p23) target = $region8
    $region5: #{tpu_custom_call.1} parent=1 // loop_body
      %s27 = ssub.s32 %s22, 1
      %s28 = ssub.s32 %s22, 2
      %s29 = sadd.s32 %s22, 1
      %s30 = ssub.s32 %s22, %s29
      %p31 = scmp.eq.s32.totalorder %s30, 0
      %s33 = sadd.s32 %s32, 1
      %s34 = scalar_select %p31, %s32, %s33
      %p37 = pneg %p31
      %p38 = scmp.eq.s32.totalorder %s22, 1
      %p39 = por %p37, %p38
      %p40 = scmp.ne.s32.totalorder %s32, %s35
      %p41 = scmp.eq.s32.totalorder %s22, 0
      %p42 = por %p40, %p41
      %p43 = scmp.ne.s32.totalorder %s32, %s35
      %p44 = scmp.eq.s32.totalorder %s27, 1
      %p45 = por %p43, %p44
      %p46 = scmp.ne.s32.totalorder %s35, %s36
      %p47 = scmp.eq.s32.totalorder %s27, 0
      %p48 = por %p46, %p47
      %p49 = scmp.ne.s32.totalorder %s35, %s36
      %p50 = scmp.eq.s32.totalorder %s28, 1
      %p51 = por %p49, %p50
      %p53 = scmp.ne.s32.totalorder %s36, %s52
      %p54 = scmp.eq.s32.totalorder %s28, 0
      %p55 = por %p53, %p54
      %s57 = sadd.s32 %s56, 1
      %p60 = scmp.eq.s32.totalorder %s22, 1
      %p61 = scmp.ne.s32.totalorder %s56, %s58
      %p62 = scmp.eq.s32.totalorder %s22, 0
      %p63 = por %p61, %p62
      %p64 = scmp.ne.s32.totalorder %s56, %s58
      %p65 = scmp.eq.s32.totalorder %s27, 1
      %p66 = por %p64, %p65
      %p67 = scmp.ne.s32.totalorder %s58, %s59
      %p68 = scmp.eq.s32.totalorder %s27, 0
      %p69 = por %p67, %p68
      %p70 = scmp.ne.s32.totalorder %s58, %s59
      %p71 = scmp.eq.s32.totalorder %s28, 1
      %p72 = por %p70, %p71
      %p74 = scmp.ne.s32.totalorder %s59, %s73
      %p75 = scmp.eq.s32.totalorder %s28, 0
      %p76 = por %p74, %p75
      %s78 = sadd.s32 %s77, 1
      %p81 = scmp.eq.s32.totalorder %s22, 1
      %p82 = scmp.ne.s32.totalorder %s77, %s79
      %p83 = scmp.eq.s32.totalorder %s22, 0
      %p84 = por %p82, %p83
      %p85 = scmp.ne.s32.totalorder %s77, %s79
      %p86 = scmp.eq.s32.totalorder %s27, 1
      %p87 = por %p85, %p86
      %p88 = scmp.ne.s32.totalorder %s79, %s80
      %p89 = scmp.eq.s32.totalorder %s27, 0
      %p90 = por %p88, %p89
      %p91 = scmp.ne.s32.totalorder %s79, %s80
      %p92 = scmp.eq.s32.totalorder %s28, 1
      %p93 = por %p91, %p92
      %p95 = scmp.ne.s32.totalorder %s80, %s94
      %p96 = scmp.eq.s32.totalorder %s28, 0
      %p97 = por %p95, %p96
      %s99 = sadd.s32 %s98, 1
      %p102 = scmp.eq.s32.totalorder %s22, 1
      %p103 = scmp.ne.s32.totalorder %s98, %s100
      %p104 = scmp.eq.s32.totalorder %s22, 0
      %p105 = por %p103, %p104
      %p106 = scmp.ne.s32.totalorder %s98, %s100
      %p107 = scmp.eq.s32.totalorder %s27, 1
      %p108 = por %p106, %p107
      %p109 = scmp.ne.s32.totalorder %s100, %s101
      %p110 = scmp.eq.s32.totalorder %s27, 0
      %p111 = por %p109, %p110
      %p112 = scmp.ne.s32.totalorder %s100, %s101
      %p113 = scmp.eq.s32.totalorder %s28, 1
      %p114 = por %p112, %p113
      %p116 = scmp.ne.s32.totalorder %s101, %s115
      %p117 = scmp.eq.s32.totalorder %s28, 0
      %p118 = por %p116, %p117
      %s120 = sadd.s32 %s119, 1
      %p123 = scmp.eq.s32.totalorder %s22, 1
      %p124 = scmp.ne.s32.totalorder %s119, %s121
      %p125 = scmp.eq.s32.totalorder %s22, 0
      %p126 = por %p124, %p125
      %p127 = scmp.ne.s32.totalorder %s119, %s121
      %p128 = scmp.eq.s32.totalorder %s27, 1
      %p129 = por %p127, %p128
      %p130 = scmp.ne.s32.totalorder %s121, %s122
      %p131 = scmp.eq.s32.totalorder %s27, 0
      %p132 = por %p130, %p131
      %p133 = scmp.ne.s32.totalorder %s121, %s122
      %p134 = scmp.eq.s32.totalorder %s28, 1
      %p135 = por %p133, %p134
      %p137 = scmp.ne.s32.totalorder %s122, %s136
      %p138 = scmp.eq.s32.totalorder %s28, 0
      %p139 = por %p137, %p138
      %s141 = sadd.s32 %s140, 1
      %p144 = scmp.eq.s32.totalorder %s22, 1
      %p145 = scmp.ne.s32.totalorder %s140, %s142
      %p146 = scmp.eq.s32.totalorder %s22, 0
      %p147 = por %p145, %p146
      %p148 = scmp.ne.s32.totalorder %s140, %s142
      %p149 = scmp.eq.s32.totalorder %s27, 1
      %p150 = por %p148, %p149
      %p151 = scmp.ne.s32.totalorder %s142, %s143
      %p152 = scmp.eq.s32.totalorder %s27, 0
      %p153 = por %p151, %p152
      %p154 = scmp.ne.s32.totalorder %s142, %s143
      %p155 = scmp.eq.s32.totalorder %s28, 1
      %p156 = por %p154, %p155
      %p158 = scmp.ne.s32.totalorder %s143, %s157
      %p159 = scmp.eq.s32.totalorder %s28, 0
      %p160 = por %p158, %p159
      %s162 = sadd.s32 %s161, 1
      %p165 = scmp.eq.s32.totalorder %s22, 1
      %p166 = scmp.ne.s32.totalorder %s161, %s163
      %p167 = scmp.eq.s32.totalorder %s22, 0
      %p168 = por %p166, %p167
      %p169 = scmp.ne.s32.totalorder %s161, %s163
      %p170 = scmp.eq.s32.totalorder %s27, 1
      %p171 = por %p169, %p170
      %p172 = scmp.ne.s32.totalorder %s163, %s164
      %p173 = scmp.eq.s32.totalorder %s27, 0
      %p174 = por %p172, %p173
      %p175 = scmp.ne.s32.totalorder %s163, %s164
      %p176 = scmp.eq.s32.totalorder %s28, 1
      %p177 = por %p175, %p176
      %p179 = scmp.ne.s32.totalorder %s164, %s178
      %p180 = scmp.eq.s32.totalorder %s28, 0
      %p181 = por %p179, %p180
      %s183 = sadd.s32 %s182, 1
      %p186 = scmp.eq.s32.totalorder %s22, 1
      %p187 = scmp.ne.s32.totalorder %s182, %s184
      %p188 = scmp.eq.s32.totalorder %s22, 0
      %p189 = por %p187, %p188
      %p190 = scmp.ne.s32.totalorder %s182, %s184
      %p191 = scmp.eq.s32.totalorder %s27, 1
      %p192 = por %p190, %p191
      %p193 = scmp.ne.s32.totalorder %s184, %s185
      %p194 = scmp.eq.s32.totalorder %s27, 0
      %p195 = por %p193, %p194
      %p196 = scmp.ne.s32.totalorder %s184, %s185
      %p197 = scmp.eq.s32.totalorder %s28, 1
      %p198 = por %p196, %p197
      %p200 = scmp.ne.s32.totalorder %s185, %s199
      %p201 = scmp.eq.s32.totalorder %s28, 0
      %p202 = por %p200, %p201
      %s203 = ssub.s32 %s22, %s29
      %p204 = scmp.eq.s32.totalorder %s203, 0
      %s206 = sadd.s32 %s205, 1
      %s207 = scalar_select %p204, %s205, %s206
      %p210 = pneg %p204
      %p211 = scmp.eq.s32.totalorder %s22, 1
      %p212 = por %p210, %p211
      %p213 = scmp.ne.s32.totalorder %s205, %s208
      %p214 = scmp.eq.s32.totalorder %s22, 0
      %p215 = por %p213, %p214
      %p216 = scmp.ne.s32.totalorder %s205, %s208
      %p217 = scmp.eq.s32.totalorder %s27, 1
      %p218 = por %p216, %p217
      %p219 = scmp.ne.s32.totalorder %s208, %s209
      %p220 = scmp.eq.s32.totalorder %s27, 0
      %p221 = por %p219, %p220
      %p222 = scmp.ne.s32.totalorder %s208, %s209
      %p223 = scmp.eq.s32.totalorder %s28, 1
      %p224 = por %p222, %p223
      %p226 = scmp.ne.s32.totalorder %s209, %s225
      %p227 = scmp.eq.s32.totalorder %s28, 0
      %p228 = por %p226, %p227
      %s229 = ssub.s32 %s22, %s29
      %p230 = scmp.eq.s32.totalorder %s229, 0
      %s232 = sadd.s32 %s231, 1
      %s233 = scalar_select %p230, %s231, %s232
      %p236 = pneg %p230
      %p237 = scmp.eq.s32.totalorder %s22, 1
      %p238 = por %p236, %p237
      %p239 = scmp.ne.s32.totalorder %s231, %s234
      %p240 = scmp.eq.s32.totalorder %s22, 0
      %p241 = por %p239, %p240
      %p242 = scmp.ne.s32.totalorder %s231, %s234
      %p243 = scmp.eq.s32.totalorder %s27, 1
      %p244 = por %p242, %p243
      %p245 = scmp.ne.s32.totalorder %s234, %s235
      %p246 = scmp.eq.s32.totalorder %s27, 0
      %p247 = por %p245, %p246
      %p248 = scmp.ne.s32.totalorder %s234, %s235
      %p249 = scmp.eq.s32.totalorder %s28, 1
      %p250 = por %p248, %p249
      %p252 = scmp.ne.s32.totalorder %s235, %s251
      %p253 = scmp.eq.s32.totalorder %s28, 0
      %p254 = por %p252, %p253
      %p255 = scmp.le.s32.totalorder 1, %s22
      %p256 = scmp.lt.s32.totalorder %s22, 3
      %p257 = pnand %p255, %p256
      %p258 = pneg %p257
      // Predicated region
      $region9: #{tpu_custom_call.1} parent=5 // pred_check
        _
      $region10: #{tpu_custom_call.1} parent=5 // pred_check_branch
        %260 = sbr.rel (%p257) target = $region12
      $region11: #{tpu_custom_call.1} parent=5 // pred_region
        %s261 = ssub.s32 %s22, 1
        // Predicated region
        $region13: #{tpu_custom_call.1} parent=11 // pred_check
          %p262 = pneg %p69
        $region14: #{tpu_custom_call.1} parent=11 // pred_check_branch
          %264 = sbr.rel (%p262) target = $region16
        $region15: #{tpu_custom_call.1} parent=11 // pred_region
          _
        $region16: #{tpu_custom_call.1} parent=11 // pred_fallthru
          _
        // Predicated region
        $region17: #{tpu_custom_call.1} parent=11 // pred_check
          %p265 = pneg %p90
        $region18: #{tpu_custom_call.1} parent=11 // pred_check_branch
          %267 = sbr.rel (%p265) target = $region20
        $region19: #{tpu_custom_call.1} parent=11 // pred_region
          _
        $region20: #{tpu_custom_call.1} parent=11 // pred_fallthru
          _
        // Predicated region
        $region21: #{tpu_custom_call.1} parent=11 // pred_check
          %p268 = pneg %p111
        $region22: #{tpu_custom_call.1} parent=11 // pred_check_branch
          %270 = sbr.rel (%p268) target = $region24
        $region23: #{tpu_custom_call.1} parent=11 // pred_region
          _
        $region24: #{tpu_custom_call.1} parent=11 // pred_fallthru
          _
        // Predicated region
        $region25: #{tpu_custom_call.1} parent=11 // pred_check
          %p271 = pneg %p132
        $region26: #{tpu_custom_call.1} parent=11 // pred_check_branch
          %273 = sbr.rel (%p271) target = $region28
        $region27: #{tpu_custom_call.1} parent=11 // pred_region
          _
        $region28: #{tpu_custom_call.1} parent=11 // pred_fallthru
          _
        // Predicated region
        $region29: #{tpu_custom_call.1} parent=11 // pred_check
          %p274 = pneg %p153
        $region30: #{tpu_custom_call.1} parent=11 // pred_check_branch
          %276 = sbr.rel (%p274) target = $region32
        $region31: #{tpu_custom_call.1} parent=11 // pred_region
          _
        $region32: #{tpu_custom_call.1} parent=11 // pred_fallthru
          _
        // Predicated region
        $region33: #{tpu_custom_call.1} parent=11 // pred_check
          %p277 = pneg %p174
        $region34: #{tpu_custom_call.1} parent=11 // pred_check_branch
          %279 = sbr.rel (%p277) target = $region36
        $region35: #{tpu_custom_call.1} parent=11 // pred_region
          _
        $region36: #{tpu_custom_call.1} parent=11 // pred_fallthru
          _
        // Predicated region
        $region37: #{tpu_custom_call.1} parent=11 // pred_check
          %p280 = pneg %p195
        $region38: #{tpu_custom_call.1} parent=11 // pred_check_branch
          %282 = sbr.rel (%p280) target = $region40
        $region39: #{tpu_custom_call.1} parent=11 // pred_region
          _
        $region40: #{tpu_custom_call.1} parent=11 // pred_fallthru
          _
      $region12: #{tpu_custom_call.1} parent=5 // pred_fallthru
        _
      %p283 = scmp.lt.s32.totalorder %s22, 2
      // Predicated region
      $region41: #{tpu_custom_call.1} parent=5 // pred_check
        %p284 = pneg %p283
      $region42: #{tpu_custom_call.1} parent=5 // pred_check_branch
        %286 = sbr.rel (%p284) target = $region44
      $region43: #{tpu_custom_call.1} parent=5 // pred_region
        // Predicated region
        $region45: #{tpu_custom_call.1} parent=43 // pred_check
          %p287 = pneg %p42
        $region46: #{tpu_custom_call.1} parent=43 // pred_check_branch
          %289 = sbr.rel (%p287) target = $region48
        $region47: #{tpu_custom_call.1} parent=43 // pred_region
          %p290 = scmp.lt.s32.totalorder %s22, 1
          %s291 = scalar_select %p290, %s22, 1
          %s292 = smul.addr %s291, 2
          %s293 = smul.addr %s292, 4
          %s294 = scalar_lea.vmem %s0, %s293
        $region48: #{tpu_custom_call.1} parent=43 // pred_fallthru
          _
      $region44: #{tpu_custom_call.1} parent=5 // pred_fallthru
        _
      %p295 = scmp.le.s32.totalorder 1, %s22
      %p296 = scmp.lt.s32.totalorder %s22, 3
      %p297 = pnand %p295, %p296
      %p298 = pneg %p297
      // Predicated region
      $region49: #{tpu_custom_call.1} parent=5 // pred_check
        _
      $region50: #{tpu_custom_call.1} parent=5 // pred_check_branch
        %300 = sbr.rel (%p297) target = $region52
      $region51: #{tpu_custom_call.1} parent=5 // pred_region
        %s301 = ssub.s32 %s22, 1
        %p302 = scmp.lt.s32.totalorder %s27, 1
        %s303 = scalar_select %p302, %s27, 1
        %s304 = smul.addr %s303, 2
        %s305 = smul.addr %s304, 4
        %s306 = scalar_lea.vmem %s0, %s305
        %p307 = pneg %p48
        %p308 = pneg %p45
        %p309 = pneg %p69
        %p310 = pneg %p66
        %p311 = pneg %p90
        %p312 = pneg %p87
        %p313 = pneg %p111
        %p314 = pneg %p108
        %p315 = pneg %p132
        %p316 = pneg %p129
        %p317 = pneg %p153
        %p318 = pneg %p150
        %p319 = pneg %p174
        %p320 = pneg %p171
        %p321 = pneg %p195
        %p322 = pneg %p192
        %p323 = pneg %p221
        %p324 = pneg %p218
        %s325 = sand.u32 %s208, 1
        %s326 = scalar_lea.sflag [#allocation7], %s325
        %s327 = sand.u32 %s208, 1
        %s328 = smul.addr %s327, 16
        %s329 = scalar_lea.vmem [#allocation6], %s328
        %p330 = pneg %p247
        %p331 = pneg %p244
        %s332 = sand.u32 %s234, 1
        %s333 = scalar_lea.sflag [#allocation9], %s332
        %s334 = sand.u32 %s234, 1
        %s335 = smul.addr %s334, 8
        %s336 = scalar_lea.vmem [#allocation8], %s335
        %p337 = scmp.lt.s32.totalorder %s27, 1
        %s338 = scalar_select %p337, %s27, 1
        %s339 = smul.addr %s338, 2
        %s340 = smul.addr %s339, 4
        %s341 = scalar_lea.vmem %s0, %s340
        %v342 = vlaneseq
        %v343 = vand.u32 %v342, 127
        %v344 = vadd.s32 %v343, 128
        %vm345 = vcmp.lt.s32.totalorder %v343, 0
        %v346 = vsub.s32 0, %v343
        %v347 = vsel %vm345, %v346, %v343
        %v348 = vshrl.u32 %v347, 4
        %v349 = vand.u32 %v347, 15
        %v350 = vsub.s32 0, %v349
        %v351 = vsel %vm345, %v350, %v349
        %vm352 = vcmp.lt.s32.totalorder %v344, 0
        %v353 = vsub.s32 0, %v344
        %v354 = vsel %vm352, %v353, %v344
        %v355 = vshrl.u32 %v354, 4
        %v356 = vand.u32 %v354, 15
        %v357 = vsub.s32 0, %v356
        %v358 = vsel %vm352, %v357, %v356
        %vm359 = vcmp.ne.s32.totalorder %v351, 0
        %vm360 = vcmp.ne.s32.totalorder %v358, 0
        %vm361 = vcmp.lt.s32.totalorder %v351, 0
        %vm362 = vcmp.lt.s32.totalorder %v358, 0
        %vm363 = vmand %vm361, %vm359
        %vm364 = vmand %vm362, %vm360
        %v365 = vadd.s32 %v351, 16
        %v366 = vadd.s32 %v358, 16
        %v367 = vsel %vm363, %v365, %v351
        %v368 = vsel %vm364, %v366, %v358
        %vm369 = vcmp.gt.s32.totalorder %v367, 0
        %vm370 = vcmp.gt.s32.totalorder %v368, 0
        %vm371 = vcmp.lt.s32.totalorder %v367, 15
        %vm372 = vcmp.lt.s32.totalorder %v368, 15
        %v373 = vld [vmem:[%s341] sm:$0xff]
        %vm374 = vcmask 134144
        %375 = vst.msk [vmem:[#allocation2] sm:$0xf] %vm374, 0.0
        %vm376 = vcmask 273544
        %377 = vst.msk [vmem:[#allocation2 + $0x8] sm:$0xf] %vm376, 0.0
        %379 = vrot.lane.b32.xlu0 %v373, 17
        %v380 = vpop.permute.xlu0 %379
        %v381 = vrot.slane %v380, 4
        %vm382 = vcmask 138240
        %v383 = vsel %vm382, %v381, %v380
        %vm386 = vcmask 1043592
        %vm387 = vcmask 1047556
        %vm388 = vmor %vm387, %vm386
        %389 = vst.msk [vmem:[#allocation2] sm:$0xff] %vm388, %v383
        %390 = vst.msk [vmem:[#allocation2 + $0x8] sm:$0xf] %vm374, %v381
        %v391 = vld [vmem:[#allocation2] sm:$0xff]
        %v392 = vsel %vm369, 1, 0
        %v393 = vsel %vm370, 1, 0
        %vm394 = vcmp.eq.s32.totalorder %v392, 1
        %vm395 = vcmp.eq.s32.totalorder %v393, 1
        %v397 = vcombine.high %v391, %v391
        %v399 = vsel %vm394, %v391, 0.0
        %v400 = vsel %vm395, %v397, 0.0
        %401 = vst [vmem:[#allocation4] sm:$0xf] %v399
        %402 = vst [vmem:[#allocation4 + $0x8] sm:$0xf] %v400
        %v403 = vld [vmem:[#allocation2] sm:$0xff]
        %v404 = vld [vmem:[#allocation2 + $0x8] sm:$0xf]
        %v407 = vcombine.low %v403, %v403
        %v408 = vcombine.low %v404, %v404
        %409 = vrot.lane.b32.xlu0 %v407, 127
        %v410 = vpop.permute.xlu0 %409
        %411 = vrot.lane.b32.xlu0 %v403, 127
        %v412 = vpop.permute.xlu0 %411
        %413 = vrot.lane.b32.xlu0 %v408, 127
        %v414 = vpop.permute.xlu0 %413
        %vm415 = vcmask 1039360
        %v416 = vsel %vm415, %v410, %v412
        %v417 = vsel %vm415, %v412, %v414
        %420 = vst [vmem:[#allocation4] sm:$0xf0] %v416
        %421 = vst [vmem:[#allocation4 + $0x8] sm:$0xf0] %v417
        %v422 = vld [vmem:[#allocation2] sm:$0xff]
        %v423 = vld [vmem:[#allocation2 + $0x8] sm:$0xf]
        %v424 = vsel %vm371, 1, 0
        %v425 = vsel %vm372, 1, 0
        %vm426 = vcmp.eq.s32.totalorder %v424, 1
        %vm427 = vcmp.eq.s32.totalorder %v425, 1
        %v430 = vcombine.high %v422, %v422
        %431 = vrot.lane.b32.xlu0 %v422, 126
        %v432 = vpop.permute.xlu0 %431
        %433 = vrot.lane.b32.xlu0 %v430, 126
        %v434 = vpop.permute.xlu0 %433
        %435 = vrot.lane.b32.xlu0 %v423, 126
        %v436 = vpop.permute.xlu0 %435
        %vm437 = vcmask 1031168
        %v438 = vsel %vm437, %v432, %v434
        %v439 = vsel %vm437, %v434, %v436
        %v442 = vsel %vm426, %v438, 0.0
        %v443 = vsel %vm427, %v439, 0.0
        %444 = vst [vmem:[#allocation4 + $0x10] sm:$0xf] %v442
        %445 = vst [vmem:[#allocation4 + $0x18] sm:$0xf] %v443
        %v446 = vld [vmem:[#allocation2] sm:$0xff]
        %v447 = vld [vmem:[#allocation2 + $0x8] sm:$0xf]
        %v450 = vcombine.high %v446, %v446
        %451 = vrot.lane.b32.xlu0 %v446, 112
        %v452 = vpop.permute.xlu0 %451
        %453 = vrot.lane.b32.xlu0 %v450, 112
        %v454 = vpop.permute.xlu0 %453
        %455 = vrot.lane.b32.xlu0 %v447, 112
        %v456 = vpop.permute.xlu0 %455
        %vm457 = vcmask 916480
        %v458 = vsel %vm457, %v452, %v454
        %v459 = vsel %vm457, %v454, %v456
        %v462 = vsel %vm394, %v458, 0.0
        %v463 = vsel %vm395, %v459, 0.0
        %v466 = vrot.slane %v462, 4
        %v467 = vrot.slane %v463, 4
        %470 = vst [vmem:[#allocation4 + $0x10] sm:$0xf0] %v466
        %471 = vst [vmem:[#allocation4 + $0x18] sm:$0xf0] %v467
        %v472 = vld [vmem:[#allocation2] sm:$0xff]
        %v473 = vld [vmem:[#allocation2 + $0x8] sm:$0xf]
        %v476 = vcombine.high %v472, %v472
        %477 = vrot.lane.b32.xlu0 %v472, 111
        %v478 = vpop.permute.xlu0 %477
        %479 = vrot.lane.b32.xlu0 %v476, 111
        %v480 = vpop.permute.xlu0 %479
        %481 = vrot.lane.b32.xlu0 %v473, 111
        %v482 = vpop.permute.xlu0 %481
        %vm483 = vcmask 908288
        %v484 = vsel %vm483, %v478, %v480
        %v485 = vsel %vm483, %v480, %v482
        %488 = vst [vmem:[#allocation4 + $0x20] sm:$0xf] %v484
        %489 = vst [vmem:[#allocation4 + $0x28] sm:$0xf] %v485
        %v490 = vld [vmem:[#allocation2] sm:$0xff]
        %v491 = vld [vmem:[#allocation2 + $0x8] sm:$0xf]
        %v494 = vcombine.high %v490, %v490
        %495 = vrot.lane.b32.xlu0 %v490, 110
        %v496 = vpop.permute.xlu0 %495
        %497 = vrot.lane.b32.xlu0 %v494, 110
        %v498 = vpop.permute.xlu0 %497
        %499 = vrot.lane.b32.xlu0 %v491, 110
        %v500 = vpop.permute.xlu0 %499
        %vm501 = vcmask 900096
        %v502 = vsel %vm501, %v496, %v498
        %v503 = vsel %vm501, %v498, %v500
        %v506 = vsel %vm426, %v502, 0.0
        %v507 = vsel %vm427, %v503, 0.0
        %v510 = vrot.slane %v506, 4
        %v511 = vrot.slane %v507, 4
        %514 = vst [vmem:[#allocation4 + $0x20] sm:$0xf0] %v510
        %515 = vst [vmem:[#allocation4 + $0x28] sm:$0xf0] %v511
        %v516 = vld [vmem:[#allocation2] sm:$0xff]
        %v517 = vld [vmem:[#allocation2 + $0x8] sm:$0xf]
        %v520 = vcombine.high %v516, %v516
        %521 = vrot.lane.b32.xlu0 %v516, 96
        %v522 = vpop.permute.xlu0 %521
        %523 = vrot.lane.b32.xlu0 %v520, 96
        %v524 = vpop.permute.xlu0 %523
        %525 = vrot.lane.b32.xlu0 %v517, 96
        %v526 = vpop.permute.xlu0 %525
        %vm527 = vcmask 785408
        %v528 = vsel %vm527, %v522, %v524
        %v529 = vsel %vm527, %v524, %v526
        %v532 = vsel %vm394, %v528, 0.0
        %v533 = vsel %vm395, %v529, 0.0
        %534 = vst [vmem:[#allocation4 + $0x30] sm:$0xf] %v532
        %535 = vst [vmem:[#allocation4 + $0x38] sm:$0xf] %v533
        %v536 = vld [vmem:[#allocation2] sm:$0xff]
        %v537 = vld [vmem:[#allocation2 + $0x8] sm:$0xf]
        %v540 = vcombine.low %v536, %v536
        %v541 = vcombine.low %v537, %v537
        %542 = vrot.lane.b32.xlu0 %v540, 95
        %v543 = vpop.permute.xlu0 %542
        %544 = vrot.lane.b32.xlu0 %v536, 95
        %v545 = vpop.permute.xlu0 %544
        %546 = vrot.lane.b32.xlu0 %v541, 95
        %v547 = vpop.permute.xlu0 %546
        %vm548 = vcmask 777216
        %v549 = vsel %vm548, %v543, %v545
        %v550 = vsel %vm548, %v545, %v547
        %553 = vst [vmem:[#allocation4 + $0x30] sm:$0xf0] %v549
        %554 = vst [vmem:[#allocation4 + $0x38] sm:$0xf0] %v550
        %v555 = vld [vmem:[#allocation2] sm:$0xff]
        %v556 = vld [vmem:[#allocation2 + $0x8] sm:$0xf]
        %v559 = vcombine.high %v555, %v555
        %560 = vrot.lane.b32.xlu0 %v555, 94
        %v561 = vpop.permute.xlu0 %560
        %562 = vrot.lane.b32.xlu0 %v559, 94
        %v563 = vpop.permute.xlu0 %562
        %564 = vrot.lane.b32.xlu0 %v556, 94
        %v565 = vpop.permute.xlu0 %564
        %vm566 = vcmask 769024
        %v567 = vsel %vm566, %v561, %v563
        %v568 = vsel %vm566, %v563, %v565
        %v571 = vsel %vm426, %v567, 0.0
        %v572 = vsel %vm427, %v568, 0.0
        %573 = vst [vmem:[#allocation4 + $0x40] sm:$0xf] %v571
        %574 = vst [vmem:[#allocation4 + $0x48] sm:$0xf] %v572
        %v575 = vld [vmem:[%s1] sm:$0xff]
        %v576 = vld [vmem:[#allocation4] sm:$0xff]
        %v577 = vld [vmem:[#allocation4 + $0x8] sm:$0xff]
        %v578 = vld [vmem:[#allocation4 + $0x10] sm:$0xff]
        %v579 = vld [vmem:[#allocation4 + $0x18] sm:$0xff]
        %v580 = vld [vmem:[#allocation4 + $0x20] sm:$0xff]
        %v581 = vld [vmem:[#allocation4 + $0x28] sm:$0xff]
        %v582 = vld [vmem:[#allocation4 + $0x30] sm:$0xff]
        %v583 = vld [vmem:[#allocation4 + $0x38] sm:$0xff]
        %v584 = vld [vmem:[#allocation4 + $0x40] sm:$0xf]
        %v585 = vld [vmem:[#allocation4 + $0x48] sm:$0xf]
        %vm586 = vcmask 293888
        %v588 = vsel %vm586, %v575, 0
        %vm590 = vcmask 1043456
        %v592 = vsel %vm590, %v584, 0
        %v595 = vsel %vm590, %v585, 0
        %597 = vmatprep.subr.mxu0 %v577
        %598 = vmatpush1.msra.mxu0 %v576
        %599 = vmatprep.subr.mxu0 %v579
        %600 = vmatpush1.msra.mxu0 %v578
        %601 = vmatprep.subr.mxu0 %v581
        %602 = vmatpush1.msra.mxu0 %v580
        %603 = vmatprep.subr.mxu0 %v583
        %604 = vmatpush1.msra.mxu0 %v582
        %605 = vmatprep.subr.mxu0 %v595
        %606 = vmatpush1.msra.mxu0 %v592
        %607 = vmatprep.subr.mxu0 0.0
        %608 = vmatpush1.msra.mxu0 0.0
        %609 = vmatprep.subr.mxu0 0.0
        %610 = vmatpush1.msra.mxu0 0.0
        %611 = vmatprep.subr.mxu0 0.0
        %612 = vmatpush1.msra.mxu0 0.0
        %613 = vmatprep.subr.mxu0 0.0
        %614 = vmatpush1.msra.mxu0 0.0
        %615 = vmatprep.subr.mxu0 0.0
        %616 = vmatpush1.msra.mxu0 0.0
        %617 = vmatprep.subr.mxu0 0.0
        %618 = vmatpush1.msra.mxu0 0.0
        %619 = vmatprep.subr.mxu0 0.0
        %620 = vmatpush1.msra.mxu0 0.0
        %621 = vmatprep.subr.mxu0 0.0
        %622 = vmatpush1.msra.mxu0 0.0
        %623 = vmatprep.subr.mxu0 0.0
        %624 = vmatpush1.msra.mxu0 0.0
        %625 = vmatprep.subr.mxu0 0.0
        %626 = vmatpush1.msra.mxu0 0.0
        %627 = vmatprep.subr.mxu0 0.0
        %628 = vmatpush1.msra.mxu0 0.0
        %629 = vmatprep.subr.mxu0 0.0
        %630 = vmatpush1.msra.mxu0 0.0
        %631 = vmatprep.subr.mxu0 0.0
        %632 = vmatpush1.msra.mxu0 0.0
        %633 = vmatprep.subr.mxu0 0.0
        %634 = vmatpush1.msra.mxu0 0.0
        %635 = vmatprep.subr.mxu0 0.0
        %636 = vmatpush1.msra.mxu0 0.0
        %637 = vmatprep.subr.mxu0 0.0
        %638 = vmatpush1.msra.mxu0 0.0
        %639 = vmatprep.subr.mxu0 0.0
        %640 = vmatpush1.msra.mxu0 0.0
        %641 = vmatprep.subr.mxu0 0.0
        %642 = vmatpush1.msra.mxu0 0.0
        %643 = vmatprep.subr.mxu0 0.0
        %644 = vmatpush1.msra.mxu0 0.0
        %645 = vmatprep.subr.mxu0 0.0
        %646 = vmatpush1.msra.mxu0 0.0
        %647 = vmatprep.subr.mxu0 0.0
        %648 = vmatpush1.msra.mxu0 0.0
        %649 = vmatprep.subr.mxu0 0.0
        %650 = vmatpush1.msra.mxu0 0.0
        %651 = vmatprep.subr.mxu0 0.0
        %652 = vmatpush1.msra.mxu0 0.0
        %653 = vmatprep.subr.mxu0 0.0
        %654 = vmatpush1.msra.mxu0 0.0
        %655 = vmatprep.subr.mxu0 0.0
        %656 = vmatpush1.msra.mxu0 0.0
        %657 = vmatprep.subr.mxu0 0.0
        %658 = vmatpush1.msra.mxu0 0.0
        %659 = vmatprep.subr.mxu0 0.0
        %660 = vmatpush1.msra.mxu0 0.0
        %661 = vmatprep.mubr.f32.mxu0 0.0
        %662 = vmatmul.mubr.f32.gmra.mrb[0].mxu0 %v588
        %v663 = vpop.f32.mrb[0].mxu0
        %v664 = vadd.f32 0.0, %v663
        %v665 = vpop.f32.mrb[0].mxu0
        %v666 = vadd.f32 0.0, %v665
        %667 = vdwg.mxu0
        %v668 = vld [vmem:[%s2] sm:$0xff]
        %670 = vset.pattern.permute.xlu0 0
        %671 = vperm.xlu0 %670, %v668
        %v672 = vpop.permute.xlu0 %671
        %v674 = vmul.f32 %v664, %v672
        %v675 = vmul.f32 %v666, %v672
        %v676 = vld [vmem:[%s3] sm:$0xff]
        %678 = vset.pattern.permute.xlu0 0
        %679 = vperm.xlu0 %678, %v676
        %v680 = vpop.permute.xlu0 %679
        %v682 = vadd.f32 %v674, %v680
        %v683 = vadd.f32 %v675, %v680
        %v684 = vmax.f32 %v682, 0.0
        %v685 = vmax.f32 %v683, 0.0
        %686 = vst.msk [vmem:[#allocation3] sm:$0xff] %vm382, 0.0
        %vm687 = vcmask 277640
        %688 = vst.msk [vmem:[#allocation3 + $0x10] sm:$0xff] %vm687, 0.0
        %691 = vrot.lane.b32.xlu0 %v684, 17
        %v692 = vpop.permute.xlu0 %691
        %693 = vrot.lane.b32.xlu0 %v685, 17
        %v694 = vpop.permute.xlu0 %693
        %v695 = vsel %vm382, %v692, %v694
        %vm699 = vcmask 1047688
        %700 = vst.msk [vmem:[#allocation3] sm:$0xff] %vm699, %v692
        %701 = vst [vmem:[#allocation3 + $0x8] sm:$0xff] %v695
        %702 = vst.msk [vmem:[#allocation3 + $0x10] sm:$0xff] %vm382, %v694
        %v703 = vld [vmem:[#allocation3] sm:$0xff]
        %v704 = vld [vmem:[#allocation3 + $0x8] sm:$0xff]
        %v705 = vsel %vm394, %v703, 0.0
        %v706 = vsel %vm395, %v704, 0.0
        %707 = vst [vmem:[#allocation5] sm:$0xff] %v705
        %708 = vst [vmem:[#allocation5 + $0x8] sm:$0xff] %v706
        %v709 = vld [vmem:[#allocation3] sm:$0xff]
        %v710 = vld [vmem:[#allocation3 + $0x8] sm:$0xff]
        %v711 = vld [vmem:[#allocation3 + $0x10] sm:$0xff]
        %715 = vrot.lane.b32.xlu0 %v709, 127
        %v716 = vpop.permute.xlu0 %715
        %717 = vrot.lane.b32.xlu0 %v710, 127
        %v718 = vpop.permute.xlu0 %717
        %719 = vrot.lane.b32.xlu0 %v711, 127
        %v720 = vpop.permute.xlu0 %719
        %v721 = vsel %vm415, %v716, %v718
        %v722 = vsel %vm415, %v718, %v720
        %725 = vst [vmem:[#allocation5 + $0x10] sm:$0xff] %v721
        %726 = vst [vmem:[#allocation5 + $0x18] sm:$0xff] %v722
        %v727 = vld [vmem:[#allocation3] sm:$0xff]
        %v728 = vld [vmem:[#allocation3 + $0x8] sm:$0xff]
        %v729 = vld [vmem:[#allocation3 + $0x10] sm:$0xff]
        %733 = vrot.lane.b32.xlu0 %v727, 126
        %v734 = vpop.permute.xlu0 %733
        %735 = vrot.lane.b32.xlu0 %v728, 126
        %v736 = vpop.permute.xlu0 %735
        %737 = vrot.lane.b32.xlu0 %v729, 126
        %v738 = vpop.permute.xlu0 %737
        %v739 = vsel %vm437, %v734, %v736
        %v740 = vsel %vm437, %v736, %v738
        %v743 = vsel %vm426, %v739, 0.0
        %v744 = vsel %vm427, %v740, 0.0
        %745 = vst [vmem:[#allocation5 + $0x20] sm:$0xff] %v743
        %746 = vst [vmem:[#allocation5 + $0x28] sm:$0xff] %v744
        %v747 = vld [vmem:[#allocation3] sm:$0xff]
        %v748 = vld [vmem:[#allocation3 + $0x8] sm:$0xff]
        %v749 = vld [vmem:[#allocation3 + $0x10] sm:$0xff]
        %753 = vrot.lane.b32.xlu0 %v747, 112
        %v754 = vpop.permute.xlu0 %753
        %755 = vrot.lane.b32.xlu0 %v748, 112
        %v756 = vpop.permute.xlu0 %755
        %757 = vrot.lane.b32.xlu0 %v749, 112
        %v758 = vpop.permute.xlu0 %757
        %v759 = vsel %vm457, %v754, %v756
        %v760 = vsel %vm457, %v756, %v758
        %v763 = vsel %vm394, %v759, 0.0
        %v764 = vsel %vm395, %v760, 0.0
        %765 = vst [vmem:[#allocation5 + $0x30] sm:$0xff] %v763
        %766 = vst [vmem:[#allocation5 + $0x38] sm:$0xff] %v764
        %v767 = vld [vmem:[#allocation3] sm:$0xff]
        %v768 = vld [vmem:[#allocation3 + $0x8] sm:$0xff]
        %v769 = vld [vmem:[#allocation3 + $0x10] sm:$0xff]
        %773 = vrot.lane.b32.xlu0 %v767, 111
        %v774 = vpop.permute.xlu0 %773
        %775 = vrot.lane.b32.xlu0 %v768, 111
        %v776 = vpop.permute.xlu0 %775
        %777 = vrot.lane.b32.xlu0 %v769, 111
        %v778 = vpop.permute.xlu0 %777
        %v779 = vsel %vm483, %v774, %v776
        %v780 = vsel %vm483, %v776, %v778
        %783 = vst [vmem:[#allocation5 + $0x40] sm:$0xff] %v779
        %784 = vst [vmem:[#allocation5 + $0x48] sm:$0xff] %v780
        %v785 = vld [vmem:[#allocation3] sm:$0xff]
        %v786 = vld [vmem:[#allocation3 + $0x8] sm:$0xff]
        %v787 = vld [vmem:[#allocation3 + $0x10] sm:$0xff]
        %791 = vrot.lane.b32.xlu0 %v785, 110
        %v792 = vpop.permute.xlu0 %791
        %793 = vrot.lane.b32.xlu0 %v786, 110
        %v794 = vpop.permute.xlu0 %793
        %795 = vrot.lane.b32.xlu0 %v787, 110
        %v796 = vpop.permute.xlu0 %795
        %v797 = vsel %vm501, %v792, %v794
        %v798 = vsel %vm501, %v794, %v796
        %v801 = vsel %vm426, %v797, 0.0
        %v802 = vsel %vm427, %v798, 0.0
        %803 = vst [vmem:[#allocation5 + $0x50] sm:$0xff] %v801
        %804 = vst [vmem:[#allocation5 + $0x58] sm:$0xff] %v802
        %v805 = vld [vmem:[#allocation3] sm:$0xff]
        %v806 = vld [vmem:[#allocation3 + $0x8] sm:$0xff]
        %v807 = vld [vmem:[#allocation3 + $0x10] sm:$0xff]
        %811 = vrot.lane.b32.xlu0 %v805, 96
        %v812 = vpop.permute.xlu0 %811
        %813 = vrot.lane.b32.xlu0 %v806, 96
        %v814 = vpop.permute.xlu0 %813
        %815 = vrot.lane.b32.xlu0 %v807, 96
        %v816 = vpop.permute.xlu0 %815
        %v817 = vsel %vm527, %v812, %v814
        %v818 = vsel %vm527, %v814, %v816
        %v821 = vsel %vm394, %v817, 0.0
        %v822 = vsel %vm395, %v818, 0.0
        %823 = vst [vmem:[#allocation5 + $0x60] sm:$0xff] %v821
        %824 = vst [vmem:[#allocation5 + $0x68] sm:$0xff] %v822
        %v825 = vld [vmem:[#allocation3] sm:$0xff]
        %v826 = vld [vmem:[#allocation3 + $0x8] sm:$0xff]
        %v827 = vld [vmem:[#allocation3 + $0x10] sm:$0xff]
        %831 = vrot.lane.b32.xlu0 %v825, 95
        %v832 = vpop.permute.xlu0 %831
        %833 = vrot.lane.b32.xlu0 %v826, 95
        %v834 = vpop.permute.xlu0 %833
        %835 = vrot.lane.b32.xlu0 %v827, 95
        %v836 = vpop.permute.xlu0 %835
        %v837 = vsel %vm548, %v832, %v834
        %v838 = vsel %vm548, %v834, %v836
        %841 = vst [vmem:[#allocation5 + $0x70] sm:$0xff] %v837
        %842 = vst [vmem:[#allocation5 + $0x78] sm:$0xff] %v838
        %v843 = vld [vmem:[#allocation3] sm:$0xff]
        %v844 = vld [vmem:[#allocation3 + $0x8] sm:$0xff]
        %v845 = vld [vmem:[#allocation3 + $0x10] sm:$0xff]
        %849 = vrot.lane.b32.xlu0 %v843, 94
        %v850 = vpop.permute.xlu0 %849
        %851 = vrot.lane.b32.xlu0 %v844, 94
        %v852 = vpop.permute.xlu0 %851
        %853 = vrot.lane.b32.xlu0 %v845, 94
        %v854 = vpop.permute.xlu0 %853
        %v855 = vsel %vm566, %v850, %v852
        %v856 = vsel %vm566, %v852, %v854
        %v859 = vsel %vm426, %v855, 0.0
        %v860 = vsel %vm427, %v856, 0.0
        %861 = vst [vmem:[#allocation5 + $0x80] sm:$0xff] %v859
        %862 = vst [vmem:[#allocation5 + $0x88] sm:$0xff] %v860
        %v863 = vld [vmem:[%s4] sm:$0xff]
        %v864 = vld [vmem:[#allocation5] sm:$0xff]
        %v865 = vld [vmem:[#allocation5 + $0x8] sm:$0xff]
        %v866 = vld [vmem:[#allocation5 + $0x10] sm:$0xff]
        %v867 = vld [vmem:[#allocation5 + $0x18] sm:$0xff]
        %v868 = vld [vmem:[#allocation5 + $0x20] sm:$0xff]
        %v869 = vld [vmem:[#allocation5 + $0x28] sm:$0xff]
        %v870 = vld [vmem:[#allocation5 + $0x30] sm:$0xff]
        %v871 = vld [vmem:[#allocation5 + $0x38] sm:$0xff]
        %v872 = vld [vmem:[#allocation5 + $0x40] sm:$0xff]
        %v873 = vld [vmem:[#allocation5 + $0x48] sm:$0xff]
        %v874 = vld [vmem:[#allocation5 + $0x50] sm:$0xff]
        %v875 = vld [vmem:[#allocation5 + $0x58] sm:$0xff]
        %v876 = vld [vmem:[#allocation5 + $0x60] sm:$0xff]
        %v877 = vld [vmem:[#allocation5 + $0x68] sm:$0xff]
        %v878 = vld [vmem:[#allocation5 + $0x70] sm:$0xff]
        %v879 = vld [vmem:[#allocation5 + $0x78] sm:$0xff]
        %v880 = vld [vmem:[#allocation5 + $0x80] sm:$0xff]
        %v881 = vld [vmem:[#allocation5 + $0x88] sm:$0xff]
        %vm882 = vcmask 588800
        %v884 = vsel %vm882, %v863, 0
        %886 = vmatprep.subr.mxu0 %v865
        %887 = vmatpush1.msra.mxu0 %v864
        %888 = vmatprep.subr.mxu0 %v867
        %889 = vmatpush1.msra.mxu0 %v866
        %890 = vmatprep.subr.mxu0 %v869
        %891 = vmatpush1.msra.mxu0 %v868
        %892 = vmatprep.subr.mxu0 %v871
        %893 = vmatpush1.msra.mxu0 %v870
        %894 = vmatprep.subr.mxu0 %v873
        %895 = vmatpush1.msra.mxu0 %v872
        %896 = vmatprep.subr.mxu0 %v875
        %897 = vmatpush1.msra.mxu0 %v874
        %898 = vmatprep.subr.mxu0 %v877
        %899 = vmatpush1.msra.mxu0 %v876
        %900 = vmatprep.subr.mxu0 %v879
        %901 = vmatpush1.msra.mxu0 %v878
        %902 = vmatprep.subr.mxu0 %v881
        %903 = vmatpush1.msra.mxu0 %v880
        %904 = vmatprep.subr.mxu0 0.0
        %905 = vmatpush1.msra.mxu0 0.0
        %906 = vmatprep.subr.mxu0 0.0
        %907 = vmatpush1.msra.mxu0 0.0
        %908 = vmatprep.subr.mxu0 0.0
        %909 = vmatpush1.msra.mxu0 0.0
        %910 = vmatprep.subr.mxu0 0.0
        %911 = vmatpush1.msra.mxu0 0.0
        %912 = vmatprep.subr.mxu0 0.0
        %913 = vmatpush1.msra.mxu0 0.0
        %914 = vmatprep.subr.mxu0 0.0
        %915 = vmatpush1.msra.mxu0 0.0
        %916 = vmatprep.subr.mxu0 0.0
        %917 = vmatpush1.msra.mxu0 0.0
        %918 = vmatprep.subr.mxu0 0.0
        %919 = vmatpush1.msra.mxu0 0.0
        %920 = vmatprep.subr.mxu0 0.0
        %921 = vmatpush1.msra.mxu0 0.0
        %922 = vmatprep.subr.mxu0 0.0
        %923 = vmatpush1.msra.mxu0 0.0
        %924 = vmatprep.subr.mxu0 0.0
        %925 = vmatpush1.msra.mxu0 0.0
        %926 = vmatprep.subr.mxu0 0.0
        %927 = vmatpush1.msra.mxu0 0.0
        %928 = vmatprep.subr.mxu0 0.0
        %929 = vmatpush1.msra.mxu0 0.0
        %930 = vmatprep.subr.mxu0 0.0
        %931 = vmatpush1.msra.mxu0 0.0
        %932 = vmatprep.subr.mxu0 0.0
        %933 = vmatpush1.msra.mxu0 0.0
        %934 = vmatprep.subr.mxu0 0.0
        %935 = vmatpush1.msra.mxu0 0.0
        %936 = vmatprep.subr.mxu0 0.0
        %937 = vmatpush1.msra.mxu0 0.0
        %938 = vmatprep.subr.mxu0 0.0
        %939 = vmatpush1.msra.mxu0 0.0
        %940 = vmatprep.subr.mxu0 0.0
        %941 = vmatpush1.msra.mxu0 0.0
        %942 = vmatprep.subr.mxu0 0.0
        %943 = vmatpush1.msra.mxu0 0.0
        %944 = vmatprep.subr.mxu0 0.0
        %945 = vmatpush1.msra.mxu0 0.0
        %946 = vmatprep.subr.mxu0 0.0
        %947 = vmatpush1.msra.mxu0 0.0
        %948 = vmatprep.subr.mxu0 0.0
        %949 = vmatpush1.msra.mxu0 0.0
        %950 = vmatprep.mubr.f32.mxu0 0.0
        %951 = vmatmul.mubr.f32.gmra.mrb[0].mxu0 %v884
        %v952 = vpop.f32.mrb[0].mxu0
        %v953 = vadd.f32 0.0, %v952
        %v954 = vpop.f32.mrb[0].mxu0
        %v955 = vadd.f32 0.0, %v954
        %956 = vdwg.mxu0
        %v957 = vld [vmem:[%s5] sm:$0xff]
        %959 = vset.pattern.permute.xlu0 0
        %960 = vperm.xlu0 %959, %v957
        %v961 = vpop.permute.xlu0 %960
        %v963 = vmul.f32 %v953, %v961
        %v964 = vmul.f32 %v955, %v961
        %v965 = vld [vmem:[%s6] sm:$0xff]
        %967 = vset.pattern.permute.xlu0 0
        %968 = vperm.xlu0 %967, %v965
        %v969 = vpop.permute.xlu0 %968
        %v971 = vadd.f32 %v963, %v969
        %v972 = vadd.f32 %v964, %v969
        %v973 = vmax.f32 %v971, 0.0
        %v974 = vmax.f32 %v972, 0.0
        %975 = vst [vmem:[%s329] sm:$0xff] %v973
        %976 = vst [vmem:[%s329 + $0x8] sm:$0xff] %v974
        %979 = vrot.lane.b32.xlu0 %v973, 17
        %v980 = vpop.permute.xlu0 %979
        %981 = vrot.lane.b32.xlu0 %v974, 17
        %v982 = vpop.permute.xlu0 %981
        %v983 = vsel %vm382, %v980, %v982
        %987 = vst.msk [vmem:[#allocation3] sm:$0xff] %vm699, %v980
        %988 = vst [vmem:[#allocation3 + $0x8] sm:$0xff] %v983
        %989 = vst.msk [vmem:[#allocation3 + $0x10] sm:$0xff] %vm382, %v982
        %v990 = vld [vmem:[#allocation3] sm:$0xff]
        %v991 = vld [vmem:[#allocation3 + $0x8] sm:$0xff]
        %v992 = vld [vmem:[#allocation3 + $0x10] sm:$0xff]
        %996 = vrot.lane.b32.xlu0 %v990, 110
        %v997 = vpop.permute.xlu0 %996
        %998 = vrot.lane.b32.xlu0 %v991, 110
        %v999 = vpop.permute.xlu0 %998
        %1000 = vrot.lane.b32.xlu0 %v992, 110
        %v1001 = vpop.permute.xlu0 %1000
        %v1002 = vsel %vm501, %v997, %v999
        %v1003 = vsel %vm501, %v999, %v1001
        %v1006 = vmax.f32 %v973, %v1002
        %v1007 = vmax.f32 %v974, %v1003
        %1008 = vrot.lane.b32.xlu0 %v990, 127
        %v1009 = vpop.permute.xlu0 %1008
        %1010 = vrot.lane.b32.xlu0 %v991, 127
        %v1011 = vpop.permute.xlu0 %1010
        %1012 = vrot.lane.b32.xlu0 %v992, 127
        %v1013 = vpop.permute.xlu0 %1012
        %v1014 = vsel %vm415, %v1009, %v1011
        %v1015 = vsel %vm415, %v1011, %v1013
        %v1019 = vmax.f32 %v990, %v1014
        %v1020 = vmax.f32 %v991, %v1015
        %v1021 = vmax.f32 %v992, %v1013
        %1025 = vrot.lane.b32.xlu0 %v1019, 95
        %v1026 = vpop.permute.xlu0 %1025
        %1027 = vrot.lane.b32.xlu0 %v1020, 95
        %v1028 = vpop.permute.xlu0 %1027
        %1029 = vrot.lane.b32.xlu0 %v1021, 95
        %v1030 = vpop.permute.xlu0 %1029
        %v1031 = vsel %vm548, %v1026, %v1028
        %v1032 = vsel %vm548, %v1028, %v1030
        %v1035 = vmax.f32 %v1006, %v1031
        %v1036 = vmax.f32 %v1007, %v1032
        %v1037 = vld [vmem:[%s7] sm:$0xff]
        %v1038 = vld [vmem:[%s7 + $0x8] sm:$0xff]
        %v1039 = vld [vmem:[%s7 + $0x10] sm:$0xff]
        %v1040 = vld [vmem:[%s7 + $0x18] sm:$0xff]
        %v1041 = vld [vmem:[%s7 + $0x20] sm:$0xff]
        %v1042 = vld [vmem:[%s7 + $0x28] sm:$0xff]
        %v1043 = vld [vmem:[%s7 + $0x30] sm:$0xff]
        %v1044 = vld [vmem:[%s7 + $0x38] sm:$0xff]
        %v1045 = vld [vmem:[%s7 + $0x40] sm:$0xff]
        %v1046 = vld [vmem:[%s7 + $0x48] sm:$0xff]
        %v1047 = vld [vmem:[%s7 + $0x50] sm:$0xff]
        %v1048 = vld [vmem:[%s7 + $0x58] sm:$0xff]
        %v1049 = vld [vmem:[%s7 + $0x60] sm:$0xff]
        %v1050 = vld [vmem:[%s7 + $0x68] sm:$0xff]
        %v1051 = vld [vmem:[%s7 + $0x70] sm:$0xff]
        %v1052 = vld [vmem:[%s7 + $0x78] sm:$0xff]
        %v1053 = vld [vmem:[%s7 + $0x80] sm:$0xff]
        %v1054 = vld [vmem:[%s7 + $0x88] sm:$0xff]
        %v1055 = vld [vmem:[%s7 + $0x90] sm:$0xff]
        %v1056 = vld [vmem:[%s7 + $0x98] sm:$0xff]
        %v1057 = vld [vmem:[%s7 + $0xa0] sm:$0xff]
        %v1058 = vld [vmem:[%s7 + $0xa8] sm:$0xff]
        %v1059 = vld [vmem:[%s7 + $0xb0] sm:$0xff]
        %v1060 = vld [vmem:[%s7 + $0xb8] sm:$0xff]
        %v1061 = vld [vmem:[%s7 + $0xc0] sm:$0xff]
        %v1062 = vld [vmem:[%s7 + $0xc8] sm:$0xff]
        %v1063 = vld [vmem:[%s7 + $0xd0] sm:$0xff]
        %v1064 = vld [vmem:[%s7 + $0xd8] sm:$0xff]
        %v1065 = vld [vmem:[%s7 + $0xe0] sm:$0xff]
        %v1066 = vld [vmem:[%s7 + $0xe8] sm:$0xff]
        %v1067 = vld [vmem:[%s7 + $0xf0] sm:$0xff]
        %v1068 = vld [vmem:[%s7 + $0xf8] sm:$0xff]
        %1069 = vmatprep.subr.mxu0 0.0
        %1070 = vmatpush1.msra.mxu0 %v1037
        %1071 = vmatprep.subr.mxu0 0.0
        %1072 = vmatpush1.msra.mxu0 %v1038
        %1073 = vmatprep.subr.mxu0 0.0
        %1074 = vmatpush1.msra.mxu0 %v1039
        %1075 = vmatprep.subr.mxu0 0.0
        %1076 = vmatpush1.msra.mxu0 %v1040
        %1077 = vmatprep.subr.mxu0 0.0
        %1078 = vmatpush1.msra.mxu0 %v1041
        %1079 = vmatprep.subr.mxu0 0.0
        %1080 = vmatpush1.msra.mxu0 %v1042
        %1081 = vmatprep.subr.mxu0 0.0
        %1082 = vmatpush1.msra.mxu0 %v1043
        %1083 = vmatprep.subr.mxu0 0.0
        %1084 = vmatpush1.msra.mxu0 %v1044
        %1085 = vmatprep.subr.mxu0 0.0
        %1086 = vmatpush1.msra.mxu0 %v1045
        %1087 = vmatprep.subr.mxu0 0.0
        %1088 = vmatpush1.msra.mxu0 %v1046
        %1089 = vmatprep.subr.mxu0 0.0
        %1090 = vmatpush1.msra.mxu0 %v1047
        %1091 = vmatprep.subr.mxu0 0.0
        %1092 = vmatpush1.msra.mxu0 %v1048
        %1093 = vmatprep.subr.mxu0 0.0
        %1094 = vmatpush1.msra.mxu0 %v1049
        %1095 = vmatprep.subr.mxu0 0.0
        %1096 = vmatpush1.msra.mxu0 %v1050
        %1097 = vmatprep.subr.mxu0 0.0
        %1098 = vmatpush1.msra.mxu0 %v1051
        %1099 = vmatprep.subr.mxu0 0.0
        %1100 = vmatpush1.msra.mxu0 %v1052
        %1101 = vmatprep.subr.mxu0 0.0
        %1102 = vmatpush1.msra.mxu0 %v1053
        %1103 = vmatprep.subr.mxu0 0.0
        %1104 = vmatpush1.msra.mxu0 %v1054
        %1105 = vmatprep.subr.mxu0 0.0
        %1106 = vmatpush1.msra.mxu0 %v1055
        %1107 = vmatprep.subr.mxu0 0.0
        %1108 = vmatpush1.msra.mxu0 %v1056
        %1109 = vmatprep.subr.mxu0 0.0
        %1110 = vmatpush1.msra.mxu0 %v1057
        %1111 = vmatprep.subr.mxu0 0.0
        %1112 = vmatpush1.msra.mxu0 %v1058
        %1113 = vmatprep.subr.mxu0 0.0
        %1114 = vmatpush1.msra.mxu0 %v1059
        %1115 = vmatprep.subr.mxu0 0.0
        %1116 = vmatpush1.msra.mxu0 %v1060
        %1117 = vmatprep.subr.mxu0 0.0
        %1118 = vmatpush1.msra.mxu0 %v1061
        %1119 = vmatprep.subr.mxu0 0.0
        %1120 = vmatpush1.msra.mxu0 %v1062
        %1121 = vmatprep.subr.mxu0 0.0
        %1122 = vmatpush1.msra.mxu0 %v1063
        %1123 = vmatprep.subr.mxu0 0.0
        %1124 = vmatpush1.msra.mxu0 %v1064
        %1125 = vmatprep.subr.mxu0 0.0
        %1126 = vmatpush1.msra.mxu0 %v1065
        %1127 = vmatprep.subr.mxu0 0.0
        %1128 = vmatpush1.msra.mxu0 %v1066
        %1129 = vmatprep.subr.mxu0 0.0
        %1130 = vmatpush1.msra.mxu0 %v1067
        %1131 = vmatprep.subr.mxu0 0.0
        %1132 = vmatpush1.msra.mxu0 %v1068
        %1133 = vmatprep.mubr.f32.mxu0 %v1036
        %1134 = vmatmul.mubr.f32.gmra.mrb[0].mxu0 %v1035
        %v1135 = vpop.f32.mrb[0].mxu0
        %v1136 = vadd.f32 0.0, %v1135
        %v1137 = vpop.f32.mrb[0].mxu0
        %1138 = vdwg.mxu0
        %vm1139 = vcmask 523264
        %1140 = vst.msk [vmem:[%s336] sm:$0xff] %vm1139, %v1136
        %s1141 = sand.u32 %s208, 1
        %s1142 = scalar_lea.sflag [#allocation7], %s1141
        %s1143 = sand.u32 %s208, 1
        %s1144 = smul.addr %s1143, 16
        %s1145 = scalar_lea.vmem [#allocation6], %s1144
        %s1146 = sand.u32 %s234, 1
        %s1147 = scalar_lea.sflag [#allocation9], %s1146
        %s1148 = sand.u32 %s234, 1
        %s1149 = smul.addr %s1148, 8
        %s1150 = scalar_lea.vmem [#allocation8], %s1149
        // Predicated region
        $region53: #{tpu_custom_call.1} parent=51 // pred_check
          %p1151 = pneg %p218
        $region54: #{tpu_custom_call.1} parent=51 // pred_check_branch
          %1153 = sbr.rel (%p1151) target = $region56
        $region55: #{tpu_custom_call.1} parent=51 // pred_region
          %s1155 = ssub.s32 256, 256
          %1156 = vsyncadd %s1142, %s1155
          %s1157 = smul.addr %s27, 2
          %s1158 = smul.addr %s1157, 128
          %s1159 = scalar_lea.hbm %s8, %s1158
          %s1161 = sshll.u32 %s1145, 4
          %s1162 = int_to_ptr.vmem [resolvable:$true] %s1161
          %1164 = dma.vmem_to_hbm [thread:$0]  %s1162, 256, %s1159, %s1142
        $region56: #{tpu_custom_call.1} parent=51 // pred_fallthru
          _
        // Predicated region
        $region57: #{tpu_custom_call.1} parent=51 // pred_check
          %p1165 = pneg %p244
        $region58: #{tpu_custom_call.1} parent=51 // pred_check_branch
          %1167 = sbr.rel (%p1165) target = $region60
        $region59: #{tpu_custom_call.1} parent=51 // pred_region
          %s1169 = ssub.s32 128, 128
          %1170 = vsyncadd %s1147, %s1169
          %s1171 = smul.addr %s27, 128
          %s1172 = scalar_lea.hbm %s9, %s1171
          %s1174 = sshll.u32 %s1150, 4
          %s1175 = int_to_ptr.vmem [resolvable:$true] %s1174
          %1177 = dma.vmem_to_hbm [thread:$0]  %s1175, 128, %s1172, %s1147
        $region60: #{tpu_custom_call.1} parent=51 // pred_fallthru
          _
      $region52: #{tpu_custom_call.1} parent=5 // pred_fallthru
        _
      %p1178 = scmp.le.s32.totalorder 2, %s22
      // Predicated region
      $region61: #{tpu_custom_call.1} parent=5 // pred_check
        %p1179 = pneg %p1178
      $region62: #{tpu_custom_call.1} parent=5 // pred_check_branch
        %1181 = sbr.rel (%p1179) target = $region64
      $region63: #{tpu_custom_call.1} parent=5 // pred_region
        %s1182 = ssub.s32 %s22, 2
        // Predicated region
        $region65: #{tpu_custom_call.1} parent=63 // pred_check
          %p1183 = pneg %p224
        $region66: #{tpu_custom_call.1} parent=63 // pred_check_branch
          %1185 = sbr.rel (%p1183) target = $region68
        $region67: #{tpu_custom_call.1} parent=63 // pred_region
          %s1186 = sand.u32 %s209, 1
          %s1187 = scalar_lea.sflag [#allocation7], %s1186
          %s1188 = sand.u32 %s209, 1
          %s1189 = smul.addr %s1188, 16
          %s1190 = scalar_lea.vmem [#allocation6], %s1189
          %1191 = dma.done %s1187, 256
        $region68: #{tpu_custom_call.1} parent=63 // pred_fallthru
          _
        // Predicated region
        $region69: #{tpu_custom_call.1} parent=63 // pred_check
          %p1192 = pneg %p250
        $region70: #{tpu_custom_call.1} parent=63 // pred_check_branch
          %1194 = sbr.rel (%p1192) target = $region72
        $region71: #{tpu_custom_call.1} parent=63 // pred_region
          %s1195 = sand.u32 %s235, 1
          %s1196 = scalar_lea.sflag [#allocation9], %s1195
          %s1197 = sand.u32 %s235, 1
          %s1198 = smul.addr %s1197, 8
          %s1199 = scalar_lea.vmem [#allocation8], %s1198
          %1200 = dma.done %s1196, 128
        $region72: #{tpu_custom_call.1} parent=63 // pred_fallthru
          _
      $region64: #{tpu_custom_call.1} parent=5 // pred_fallthru
        _
    $region6: #{tpu_custom_call.1} parent=1 // loop_footer
      %s26 = sadd.s32 1, %s22
    $region7: #{tpu_custom_call.1} parent=1 // loop_footer_branch
      %21 = sbr.rel target = $region3
    $region8: #{tpu_custom_call.1} parent=1 // loop_exit
      _
    %1201 = vsyncpa [#allocation7], 1
    %s1202 = scalar_lea.sflag [#allocation7], 1
    %1203 = vsyncpa %s1202, 1
    %1204 = vsyncpa [#allocation9], 1
    %s1205 = scalar_lea.sflag [#allocation9], 1
    %1206 = vsyncpa %s1205, 1

</llo_original>
